<compile_context>
chip_gen: v7x
topology: tpu7x:2x2x1
jax: 0.10.0
libtpu: 0.0.40
codegen_flags: <defaults>
</compile_context>

<pallas_src>
import numpy as np
import jax
import jax.numpy as jnp
from jax import lax
from jax.experimental import pallas as pl
from jax.experimental.pallas import tpu as pltpu


# ----------------------------------------------------------------------------
# Single fused kernel.
#
# Layout conventions:
#   * recurrent state is stacked on rows: rows [0:B) = forward direction,
#     rows [B:2B) = backward direction  (this is exactly the row-major (2B, H)
#     view of the PyTorch (2, B, H) h_n/c_n tensors).
#   * packed gate weights: columns [0:4H) = forward gates (i,f,g,o, each H
#     wide), columns [4H:8H) = backward gates.
# ----------------------------------------------------------------------------
def _doc2vec_kernel(ids_ref, table_ref, w_in_ref, b_in_ref, w_hh_ref,
                    h0_ref, c0_ref, w_lin_ref, b_lin_ref, out_ref, lin_scratch):
    SB = ids_ref.shape[0]          # S * B
    V, E = table_ref.shape
    B2, H = h0_ref.shape           # B2 = 2*B (both directions stacked on rows)
    B = B2 // 2
    S = SB // B
    G = w_in_ref.shape[1]          # 8*H  (2 directions x 4 packed gates)
    H4 = G // 2                    # 4*H  (one direction's packed gates)
    f32 = jnp.float32

    # ---- 1) Embedding gather as a one-hot matmul on the (idle) MXU.
    #         Avoids a separate XLA gather + HBM intermediate. Only sensible
    #         at toy vocab sizes; a real vocab would use a DMA gather.
    ids = ids_ref[...]                                            # (S*B, 1) i32
    vocab_iota = lax.broadcasted_iota(jnp.int32, (SB, V), 1)
    onehot = (vocab_iota == ids).astype(f32)                      # (S*B, V)
    emb = jnp.dot(onehot, table_ref[...], preferred_element_type=f32)   # (S*B, E)

    # ---- 2) Input projection for all timesteps & both directions in one
    #         lane-dense matmul; combined bias folded in once (not per step).
    xproj = (jnp.dot(emb, w_in_ref[...], preferred_element_type=f32)
             + b_in_ref[...])                                     # (S*B, 8H)

    # ---- 3) Fused bidirectional recurrence, fully unrolled (S is static).
    w_hh = w_hh_ref[...]                                          # (H, 8H)
    row = lax.broadcasted_iota(jnp.int32, (B2, H4), 0)
    is_fwd_row = row < B                                          # (2B, 4H)

    h = h0_ref[...]                                               # (2B, H)
    c = c0_ref[...]                                               # (2B, H)
    for t in range(S):                                            # static unroll
        # One lane-dense recurrent matmul for both directions.
        ga_all = jnp.dot(h, w_hh, preferred_element_type=f32)     # (2B, 8H)
        # Forward rows use the fwd gate columns, backward rows the bwd ones.
        ga = jnp.where(is_fwd_row, ga_all[:, :H4], ga_all[:, H4:])  # (2B, 4H)
        # Precomputed input projections: fwd reads time t, bwd reads S-1-t.
        p_f = xproj[t * B:(t + 1) * B, :H4]                       # (B, 4H)
        p_b = xproj[(S - 1 - t) * B:(S - t) * B, H4:]             # (B, 4H)
        gates = ga + jnp.concatenate([p_f, p_b], axis=0)          # (2B, 4H)

        i_g = jax.nn.sigmoid(gates[:, 0 * H:1 * H])
        f_g = jax.nn.sigmoid(gates[:, 1 * H:2 * H])
        g_g = jnp.tanh(gates[:, 2 * H:3 * H])
        o_g = jax.nn.sigmoid(gates[:, 3 * H:4 * H])
        c = f_g * c + i_g * g_g
        h = o_g * jnp.tanh(c)

    # ---- 4) added = h_n + c_n; Frobenius normalize over the whole (2,B,H).
    added = h + c                                                 # (2B, H)
    inv = lax.rsqrt(jnp.sum(added * added, keepdims=True))        # (1, 1)
    normed = added * inv                                          # (2B, H)

    # ---- 5) Exact row-major `.view(-1, 2H)` of the (2, B, H) tensor:
    #         output row b' = concat(stack_row[2b'], stack_row[2b'+1]).
    for bp in range(B):
        lin_scratch[bp:bp + 1, 0:H] = normed[2 * bp:2 * bp + 1, :]
        lin_scratch[bp:bp + 1, H:2 * H] = normed[2 * bp + 1:2 * bp + 2, :]

    # ---- 6) Linear + softmax(dim=1), fused in the same kernel.
    logits = (jnp.dot(lin_scratch[...], w_lin_ref[...], preferred_element_type=f32)
              + b_lin_ref[...])                                   # (B, O)
    m = jnp.max(logits, axis=1, keepdims=True)
    e = jnp.exp(logits - m)
    out_ref[...] = e * pl.reciprocal(jnp.sum(e, axis=1, keepdims=True), approx=True)


# ----------------------------------------------------------------------------
# Parameter init (deterministic, mirrors the module's __init__ shapes).
# ----------------------------------------------------------------------------
def init_params(key, vocab_size, embedding_size, hidden, output_size, batch_size):
    keys = jax.random.split(key, 8)
    kH = 1.0 / np.sqrt(hidden)
    kL = 1.0 / np.sqrt(2 * hidden)
    params = dict(
        embedding=jax.random.normal(keys[0], (vocab_size, embedding_size), jnp.float32),
        # (dir, gate, in_features, H); gate order i, f, g, o; pre-transposed.
        wih=jax.random.uniform(keys[1], (2, 4, embedding_size, hidden), jnp.float32, -kH, kH),
        whh=jax.random.uniform(keys[2], (2, 4, hidden, hidden), jnp.float32, -kH, kH),
        # combined bias b_ih + b_hh, broadcastable as (dir, gate, 1, H)
        b=jax.random.uniform(keys[3], (2, 4, 1, hidden), jnp.float32, -2 * kH, 2 * kH),
        w_lin=jax.random.uniform(keys[4], (2 * hidden, output_size), jnp.float32, -kL, kL),
        b_lin=jax.random.uniform(keys[5], (1, output_size), jnp.float32, -kL, kL),
        # TODO(synk): PyTorch redraws (h0, c0) with torch.randn on every forward;
        # kept fixed/deterministic here so the forward is reproducible.
        h0=jax.random.normal(keys[6], (2, batch_size, hidden), jnp.float32),
        c0=jax.random.normal(keys[7], (2, batch_size, hidden), jnp.float32),
    )
    return params


# ----------------------------------------------------------------------------
# Forward wrapper: packs weights lane-dense and launches the single kernel.
# ----------------------------------------------------------------------------
def doc2vec_forward(sentence, params):
    S, B = sentence.shape
    H = params["whh"].shape[-1]
    O = params["w_lin"].shape[1]

    def pack(w):   # (2, 4, in, H) -> (in, 8H): [fwd i f g o | bwd i f g o]
        return jnp.concatenate(
            [jnp.concatenate([w[d, g] for g in range(4)], axis=1) for d in range(2)],
            axis=1)

    w_in = pack(params["wih"])                    # (E, 8H)
    w_hh = pack(params["whh"])                    # (H, 8H)
    b_in = pack(params["b"])                      # (1, 8H)

    ids = sentence.reshape(S * B, 1).astype(jnp.int32)
    h0 = params["h0"].reshape(2 * B, H)           # rows: [fwd batch | bwd batch]
    c0 = params["c0"].reshape(2 * B, H)

    vmem = lambda: pl.BlockSpec(memory_space=pltpu.MemorySpace.VMEM)
    out = pl.pallas_call(
        _doc2vec_kernel,
        out_shape=jax.ShapeDtypeStruct((B, O), jnp.float32),
        in_specs=[vmem() for _ in range(9)],
        out_specs=vmem(),
        scratch_shapes=[pltpu.VMEM((B, 2 * H), jnp.float32)],
    )(ids, params["embedding"], w_in, b_in, w_hh, h0, c0,
      params["w_lin"], params["b_lin"])
    return out


# ----------------------------------------------------------------------------
# Pure-JAX reference for verification (uses the unpacked params directly).
# ----------------------------------------------------------------------------
def reference_forward(sentence, params):
    emb = params["embedding"][sentence]
    S, B = sentence.shape
    H = params["whh"].shape[-1]

    def run(d, reverse):
        h, c = params["h0"][d], params["c0"][d]
        order = range(S - 1, -1, -1) if reverse else range(S)
        for t in order:
            x = emb[t]
            g = [x @ params["wih"][d, k] + h @ params["whh"][d, k] + params["b"][d, k]
                 for k in range(4)]
            i_g = jax.nn.sigmoid(g[0])
            f_g = jax.nn.sigmoid(g[1])
            g_g = jnp.tanh(g[2])
            o_g = jax.nn.sigmoid(g[3])
            c = f_g * c + i_g * g_g
            h = o_g * jnp.tanh(c)
        return h, c

    hf, cf = run(0, False)
    hb, cb = run(1, True)
    added = jnp.stack([hf + cf, hb + cb])        # (2, B, H)
    normed = added / jnp.linalg.norm(added)
    lin = normed.reshape(B, 2 * H) @ params["w_lin"] + params["b_lin"]
    return jax.nn.softmax(lin, axis=1)


if __name__ == "__main__":
    # Small shapes consistent with the module's forward.
    VOCAB, EMBED, HIDDEN, OUT, BATCH, SEQ = 64, 32, 32, 16, 4, 8

    key = jax.random.PRNGKey(0)
    pkey, skey = jax.random.split(key)
    params = init_params(pkey, VOCAB, EMBED, HIDDEN, OUT, BATCH)
    sentence = jax.random.randint(skey, (SEQ, BATCH), 0, VOCAB, dtype=jnp.int32)

    fwd = jax.jit(doc2vec_forward)
    out = jax.block_until_ready(fwd(sentence, params))

    ref = jax.block_until_ready(reference_forward(sentence, params))
    assert out.shape == (BATCH, OUT)
    assert np.allclose(np.asarray(out), np.asarray(ref), atol=5e-3, rtol=5e-3)

    print("KERNEL_OK")
</pallas_src>

<mosaic_0001>
module attributes {stable_mosaic.version = 11 : i64} {
  func.func @_doc2vec_kernel(%arg0: memref<32x1xi32, #tpu.memory_space<vmem>>, %arg1: memref<64x32xf32, #tpu.memory_space<vmem>>, %arg2: memref<32x256xf32, #tpu.memory_space<vmem>>, %arg3: memref<1x256xf32, #tpu.memory_space<vmem>>, %arg4: memref<32x256xf32, #tpu.memory_space<vmem>>, %arg5: memref<8x32xf32, #tpu.memory_space<vmem>>, %arg6: memref<8x32xf32, #tpu.memory_space<vmem>>, %arg7: memref<64x16xf32, #tpu.memory_space<vmem>>, %arg8: memref<1x16xf32, #tpu.memory_space<vmem>>, %arg9: memref<4x16xf32, #tpu.memory_space<vmem>>, %arg10: memref<4x64xf32, #tpu.memory_space<vmem>>) attributes {dimension_semantics = [], scalar_prefetch = 0 : i64, scratch_operands = 1 : i64, tpu.core_type = #tpu.core_type<tc>} {
    %c0 = arith.constant 0 : index
    %c0_0 = arith.constant 0 : index
    %0 = vector.load %arg0[%c0, %c0_0] : memref<32x1xi32, #tpu.memory_space<vmem>>, vector<32x1xi32>
    %1 = tpu.iota {dimensions = array<i32: 1>} : vector<32x64xi32>
    %2 = vector.broadcast %0 : vector<32x1xi32> to vector<32x64xi32>
    %3 = arith.cmpi eq, %1, %2 : vector<32x64xi32>
    %4 = arith.extui %3 : vector<32x64xi1> to vector<32x64xi32>
    %5 = arith.sitofp %4 : vector<32x64xi32> to vector<32x64xf32>
    %c0_1 = arith.constant 0 : index
    %c0_2 = arith.constant 0 : index
    %6 = vector.load %arg1[%c0_1, %c0_2] : memref<64x32xf32, #tpu.memory_space<vmem>>, vector<64x32xf32>
    %cst = arith.constant dense<0.000000e+00> : vector<32x32xf32>
    %7 = tpu.matmul %5, %6, %cst {dimension_numbers = #tpu.dot_dimension_numbers<[1], [0], [0], [1], [0, 0, 1, 1], [], []>} : vector<32x64xf32>, vector<64x32xf32>, vector<32x32xf32> -> vector<32x32xf32>
    %c0_3 = arith.constant 0 : index
    %c0_4 = arith.constant 0 : index
    %8 = vector.load %arg2[%c0_3, %c0_4] : memref<32x256xf32, #tpu.memory_space<vmem>>, vector<32x256xf32>
    %cst_5 = arith.constant dense<0.000000e+00> : vector<32x256xf32>
    %9 = tpu.matmul %7, %8, %cst_5 {dimension_numbers = #tpu.dot_dimension_numbers<[1], [0], [0], [1], [0, 0, 1, 1], [], []>} : vector<32x32xf32>, vector<32x256xf32>, vector<32x256xf32> -> vector<32x256xf32>
    %c0_6 = arith.constant 0 : index
    %c0_7 = arith.constant 0 : index
    %10 = vector.load %arg3[%c0_6, %c0_7] : memref<1x256xf32, #tpu.memory_space<vmem>>, vector<1x256xf32>
    %11 = vector.broadcast %10 : vector<1x256xf32> to vector<32x256xf32>
    %12 = arith.addf %9, %11 : vector<32x256xf32>
    %c0_8 = arith.constant 0 : index
    %c0_9 = arith.constant 0 : index
    %13 = vector.load %arg4[%c0_8, %c0_9] : memref<32x256xf32, #tpu.memory_space<vmem>>, vector<32x256xf32>
    %14 = tpu.iota {dimensions = array<i32: 0>} : vector<8x128xi32>
    %c4_i32 = arith.constant 4 : i32
    %15 = vector.broadcast %c4_i32 : i32 to vector<8x128xi32>
    %16 = arith.cmpi slt, %14, %15 : vector<8x128xi32>
    %c0_10 = arith.constant 0 : index
    %c0_11 = arith.constant 0 : index
    %17 = vector.load %arg5[%c0_10, %c0_11] : memref<8x32xf32, #tpu.memory_space<vmem>>, vector<8x32xf32>
    %c0_12 = arith.constant 0 : index
    %c0_13 = arith.constant 0 : index
    %18 = vector.load %arg6[%c0_12, %c0_13] : memref<8x32xf32, #tpu.memory_space<vmem>>, vector<8x32xf32>
    %cst_14 = arith.constant dense<0.000000e+00> : vector<8x256xf32>
    %19 = tpu.matmul %17, %13, %cst_14 {dimension_numbers = #tpu.dot_dimension_numbers<[1], [0], [0], [1], [0, 0, 1, 1], [], []>} : vector<8x32xf32>, vector<32x256xf32>, vector<8x256xf32> -> vector<8x256xf32>
    %20 = vector.extract_strided_slice %19 {offsets = [0, 0], sizes = [8, 128], strides = [1, 1]} : vector<8x256xf32> to vector<8x128xf32>
    %21 = vector.extract_strided_slice %19 {offsets = [0, 128], sizes = [8, 128], strides = [1, 1]} : vector<8x256xf32> to vector<8x128xf32>
    %22 = arith.select %16, %20, %21 : vector<8x128xi1>, vector<8x128xf32>
    %23 = vector.extract_strided_slice %12 {offsets = [0, 0], sizes = [4, 128], strides = [1, 1]} : vector<32x256xf32> to vector<4x128xf32>
    %24 = vector.extract_strided_slice %12 {offsets = [28, 128], sizes = [4, 128], strides = [1, 1]} : vector<32x256xf32> to vector<4x128xf32>
    %25 = tpu.concatenate %23, %24 in 0 : vector<4x128xf32>, vector<4x128xf32> -> vector<8x128xf32>
    %26 = arith.addf %22, %25 : vector<8x128xf32>
    %27 = vector.extract_strided_slice %26 {offsets = [0, 0], sizes = [8, 32], strides = [1, 1]} : vector<8x128xf32> to vector<8x32xf32>
    %28 = arith.negf %27 : vector<8x32xf32>
    %29 = math.exp %28 : vector<8x32xf32>
    %cst_15 = arith.constant 1.000000e+00 : f32
    %30 = vector.broadcast %cst_15 : f32 to vector<8x32xf32>
    %31 = arith.addf %30, %29 : vector<8x32xf32>
    %32 = arith.divf %30, %31 : vector<8x32xf32>
    %33 = vector.extract_strided_slice %26 {offsets = [0, 32], sizes = [8, 32], strides = [1, 1]} : vector<8x128xf32> to vector<8x32xf32>
    %34 = arith.negf %33 : vector<8x32xf32>
    %35 = math.exp %34 : vector<8x32xf32>
    %cst_16 = arith.constant 1.000000e+00 : f32
    %36 = vector.broadcast %cst_16 : f32 to vector<8x32xf32>
    %37 = arith.addf %36, %35 : vector<8x32xf32>
    %38 = arith.divf %36, %37 : vector<8x32xf32>
    %39 = vector.extract_strided_slice %26 {offsets = [0, 64], sizes = [8, 32], strides = [1, 1]} : vector<8x128xf32> to vector<8x32xf32>
    %40 = math.tanh %39 : vector<8x32xf32>
    %41 = vector.extract_strided_slice %26 {offsets = [0, 96], sizes = [8, 32], strides = [1, 1]} : vector<8x128xf32> to vector<8x32xf32>
    %42 = arith.negf %41 : vector<8x32xf32>
    %43 = math.exp %42 : vector<8x32xf32>
    %cst_17 = arith.constant 1.000000e+00 : f32
    %44 = vector.broadcast %cst_17 : f32 to vector<8x32xf32>
    %45 = arith.addf %44, %43 : vector<8x32xf32>
    %46 = arith.divf %44, %45 : vector<8x32xf32>
    %47 = arith.mulf %38, %18 : vector<8x32xf32>
    %48 = arith.mulf %32, %40 : vector<8x32xf32>
    %49 = arith.addf %47, %48 : vector<8x32xf32>
    %50 = math.tanh %49 : vector<8x32xf32>
    %51 = arith.mulf %46, %50 : vector<8x32xf32>
    %cst_18 = arith.constant dense<0.000000e+00> : vector<8x256xf32>
    %52 = tpu.matmul %51, %13, %cst_18 {dimension_numbers = #tpu.dot_dimension_numbers<[1], [0], [0], [1], [0, 0, 1, 1], [], []>} : vector<8x32xf32>, vector<32x256xf32>, vector<8x256xf32> -> vector<8x256xf32>
    %53 = vector.extract_strided_slice %52 {offsets = [0, 0], sizes = [8, 128], strides = [1, 1]} : vector<8x256xf32> to vector<8x128xf32>
    %54 = vector.extract_strided_slice %52 {offsets = [0, 128], sizes = [8, 128], strides = [1, 1]} : vector<8x256xf32> to vector<8x128xf32>
    %55 = arith.select %16, %53, %54 : vector<8x128xi1>, vector<8x128xf32>
    %56 = vector.extract_strided_slice %12 {offsets = [4, 0], sizes = [4, 128], strides = [1, 1]} : vector<32x256xf32> to vector<4x128xf32>
    %57 = vector.extract_strided_slice %12 {offsets = [24, 128], sizes = [4, 128], strides = [1, 1]} : vector<32x256xf32> to vector<4x128xf32>
    %58 = tpu.concatenate %56, %57 in 0 : vector<4x128xf32>, vector<4x128xf32> -> vector<8x128xf32>
    %59 = arith.addf %55, %58 : vector<8x128xf32>
    %60 = vector.extract_strided_slice %59 {offsets = [0, 0], sizes = [8, 32], strides = [1, 1]} : vector<8x128xf32> to vector<8x32xf32>
    %61 = arith.negf %60 : vector<8x32xf32>
    %62 = math.exp %61 : vector<8x32xf32>
    %cst_19 = arith.constant 1.000000e+00 : f32
    %63 = vector.broadcast %cst_19 : f32 to vector<8x32xf32>
    %64 = arith.addf %63, %62 : vector<8x32xf32>
    %65 = arith.divf %63, %64 : vector<8x32xf32>
    %66 = vector.extract_strided_slice %59 {offsets = [0, 32], sizes = [8, 32], strides = [1, 1]} : vector<8x128xf32> to vector<8x32xf32>
    %67 = arith.negf %66 : vector<8x32xf32>
    %68 = math.exp %67 : vector<8x32xf32>
    %cst_20 = arith.constant 1.000000e+00 : f32
    %69 = vector.broadcast %cst_20 : f32 to vector<8x32xf32>
    %70 = arith.addf %69, %68 : vector<8x32xf32>
    %71 = arith.divf %69, %70 : vector<8x32xf32>
    %72 = vector.extract_strided_slice %59 {offsets = [0, 64], sizes = [8, 32], strides = [1, 1]} : vector<8x128xf32> to vector<8x32xf32>
    %73 = math.tanh %72 : vector<8x32xf32>
    %74 = vector.extract_strided_slice %59 {offsets = [0, 96], sizes = [8, 32], strides = [1, 1]} : vector<8x128xf32> to vector<8x32xf32>
    %75 = arith.negf %74 : vector<8x32xf32>
    %76 = math.exp %75 : vector<8x32xf32>
    %cst_21 = arith.constant 1.000000e+00 : f32
    %77 = vector.broadcast %cst_21 : f32 to vector<8x32xf32>
    %78 = arith.addf %77, %76 : vector<8x32xf32>
    %79 = arith.divf %77, %78 : vector<8x32xf32>
    %80 = arith.mulf %71, %49 : vector<8x32xf32>
    %81 = arith.mulf %65, %73 : vector<8x32xf32>
    %82 = arith.addf %80, %81 : vector<8x32xf32>
    %83 = math.tanh %82 : vector<8x32xf32>
    %84 = arith.mulf %79, %83 : vector<8x32xf32>
    %cst_22 = arith.constant dense<0.000000e+00> : vector<8x256xf32>
    %85 = tpu.matmul %84, %13, %cst_22 {dimension_numbers = #tpu.dot_dimension_numbers<[1], [0], [0], [1], [0, 0, 1, 1], [], []>} : vector<8x32xf32>, vector<32x256xf32>, vector<8x256xf32> -> vector<8x256xf32>
    %86 = vector.extract_strided_slice %85 {offsets = [0, 0], sizes = [8, 128], strides = [1, 1]} : vector<8x256xf32> to vector<8x128xf32>
    %87 = vector.extract_strided_slice %85 {offsets = [0, 128], sizes = [8, 128], strides = [1, 1]} : vector<8x256xf32> to vector<8x128xf32>
    %88 = arith.select %16, %86, %87 : vector<8x128xi1>, vector<8x128xf32>
    %89 = vector.extract_strided_slice %12 {offsets = [8, 0], sizes = [4, 128], strides = [1, 1]} : vector<32x256xf32> to vector<4x128xf32>
    %90 = vector.extract_strided_slice %12 {offsets = [20, 128], sizes = [4, 128], strides = [1, 1]} : vector<32x256xf32> to vector<4x128xf32>
    %91 = tpu.concatenate %89, %90 in 0 : vector<4x128xf32>, vector<4x128xf32> -> vector<8x128xf32>
    %92 = arith.addf %88, %91 : vector<8x128xf32>
    %93 = vector.extract_strided_slice %92 {offsets = [0, 0], sizes = [8, 32], strides = [1, 1]} : vector<8x128xf32> to vector<8x32xf32>
    %94 = arith.negf %93 : vector<8x32xf32>
    %95 = math.exp %94 : vector<8x32xf32>
    %cst_23 = arith.constant 1.000000e+00 : f32
    %96 = vector.broadcast %cst_23 : f32 to vector<8x32xf32>
    %97 = arith.addf %96, %95 : vector<8x32xf32>
    %98 = arith.divf %96, %97 : vector<8x32xf32>
    %99 = vector.extract_strided_slice %92 {offsets = [0, 32], sizes = [8, 32], strides = [1, 1]} : vector<8x128xf32> to vector<8x32xf32>
    %100 = arith.negf %99 : vector<8x32xf32>
    %101 = math.exp %100 : vector<8x32xf32>
    %cst_24 = arith.constant 1.000000e+00 : f32
    %102 = vector.broadcast %cst_24 : f32 to vector<8x32xf32>
    %103 = arith.addf %102, %101 : vector<8x32xf32>
    %104 = arith.divf %102, %103 : vector<8x32xf32>
    %105 = vector.extract_strided_slice %92 {offsets = [0, 64], sizes = [8, 32], strides = [1, 1]} : vector<8x128xf32> to vector<8x32xf32>
    %106 = math.tanh %105 : vector<8x32xf32>
    %107 = vector.extract_strided_slice %92 {offsets = [0, 96], sizes = [8, 32], strides = [1, 1]} : vector<8x128xf32> to vector<8x32xf32>
    %108 = arith.negf %107 : vector<8x32xf32>
    %109 = math.exp %108 : vector<8x32xf32>
    %cst_25 = arith.constant 1.000000e+00 : f32
    %110 = vector.broadcast %cst_25 : f32 to vector<8x32xf32>
    %111 = arith.addf %110, %109 : vector<8x32xf32>
    %112 = arith.divf %110, %111 : vector<8x32xf32>
    %113 = arith.mulf %104, %82 : vector<8x32xf32>
    %114 = arith.mulf %98, %106 : vector<8x32xf32>
    %115 = arith.addf %113, %114 : vector<8x32xf32>
    %116 = math.tanh %115 : vector<8x32xf32>
    %117 = arith.mulf %112, %116 : vector<8x32xf32>
    %cst_26 = arith.constant dense<0.000000e+00> : vector<8x256xf32>
    %118 = tpu.matmul %117, %13, %cst_26 {dimension_numbers = #tpu.dot_dimension_numbers<[1], [0], [0], [1], [0, 0, 1, 1], [], []>} : vector<8x32xf32>, vector<32x256xf32>, vector<8x256xf32> -> vector<8x256xf32>
    %119 = vector.extract_strided_slice %118 {offsets = [0, 0], sizes = [8, 128], strides = [1, 1]} : vector<8x256xf32> to vector<8x128xf32>
    %120 = vector.extract_strided_slice %118 {offsets = [0, 128], sizes = [8, 128], strides = [1, 1]} : vector<8x256xf32> to vector<8x128xf32>
    %121 = arith.select %16, %119, %120 : vector<8x128xi1>, vector<8x128xf32>
    %122 = vector.extract_strided_slice %12 {offsets = [12, 0], sizes = [4, 128], strides = [1, 1]} : vector<32x256xf32> to vector<4x128xf32>
    %123 = vector.extract_strided_slice %12 {offsets = [16, 128], sizes = [4, 128], strides = [1, 1]} : vector<32x256xf32> to vector<4x128xf32>
    %124 = tpu.concatenate %122, %123 in 0 : vector<4x128xf32>, vector<4x128xf32> -> vector<8x128xf32>
    %125 = arith.addf %121, %124 : vector<8x128xf32>
    %126 = vector.extract_strided_slice %125 {offsets = [0, 0], sizes = [8, 32], strides = [1, 1]} : vector<8x128xf32> to vector<8x32xf32>
    %127 = arith.negf %126 : vector<8x32xf32>
    %128 = math.exp %127 : vector<8x32xf32>
    %cst_27 = arith.constant 1.000000e+00 : f32
    %129 = vector.broadcast %cst_27 : f32 to vector<8x32xf32>
    %130 = arith.addf %129, %128 : vector<8x32xf32>
    %131 = arith.divf %129, %130 : vector<8x32xf32>
    %132 = vector.extract_strided_slice %125 {offsets = [0, 32], sizes = [8, 32], strides = [1, 1]} : vector<8x128xf32> to vector<8x32xf32>
    %133 = arith.negf %132 : vector<8x32xf32>
    %134 = math.exp %133 : vector<8x32xf32>
    %cst_28 = arith.constant 1.000000e+00 : f32
    %135 = vector.broadcast %cst_28 : f32 to vector<8x32xf32>
    %136 = arith.addf %135, %134 : vector<8x32xf32>
    %137 = arith.divf %135, %136 : vector<8x32xf32>
    %138 = vector.extract_strided_slice %125 {offsets = [0, 64], sizes = [8, 32], strides = [1, 1]} : vector<8x128xf32> to vector<8x32xf32>
    %139 = math.tanh %138 : vector<8x32xf32>
    %140 = vector.extract_strided_slice %125 {offsets = [0, 96], sizes = [8, 32], strides = [1, 1]} : vector<8x128xf32> to vector<8x32xf32>
    %141 = arith.negf %140 : vector<8x32xf32>
    %142 = math.exp %141 : vector<8x32xf32>
    %cst_29 = arith.constant 1.000000e+00 : f32
    %143 = vector.broadcast %cst_29 : f32 to vector<8x32xf32>
    %144 = arith.addf %143, %142 : vector<8x32xf32>
    %145 = arith.divf %143, %144 : vector<8x32xf32>
    %146 = arith.mulf %137, %115 : vector<8x32xf32>
    %147 = arith.mulf %131, %139 : vector<8x32xf32>
    %148 = arith.addf %146, %147 : vector<8x32xf32>
    %149 = math.tanh %148 : vector<8x32xf32>
    %150 = arith.mulf %145, %149 : vector<8x32xf32>
    %cst_30 = arith.constant dense<0.000000e+00> : vector<8x256xf32>
    %151 = tpu.matmul %150, %13, %cst_30 {dimension_numbers = #tpu.dot_dimension_numbers<[1], [0], [0], [1], [0, 0, 1, 1], [], []>} : vector<8x32xf32>, vector<32x256xf32>, vector<8x256xf32> -> vector<8x256xf32>
    %152 = vector.extract_strided_slice %151 {offsets = [0, 0], sizes = [8, 128], strides = [1, 1]} : vector<8x256xf32> to vector<8x128xf32>
    %153 = vector.extract_strided_slice %151 {offsets = [0, 128], sizes = [8, 128], strides = [1, 1]} : vector<8x256xf32> to vector<8x128xf32>
    %154 = arith.select %16, %152, %153 : vector<8x128xi1>, vector<8x128xf32>
    %155 = vector.extract_strided_slice %12 {offsets = [16, 0], sizes = [4, 128], strides = [1, 1]} : vector<32x256xf32> to vector<4x128xf32>
    %156 = vector.extract_strided_slice %12 {offsets = [12, 128], sizes = [4, 128], strides = [1, 1]} : vector<32x256xf32> to vector<4x128xf32>
    %157 = tpu.concatenate %155, %156 in 0 : vector<4x128xf32>, vector<4x128xf32> -> vector<8x128xf32>
    %158 = arith.addf %154, %157 : vector<8x128xf32>
    %159 = vector.extract_strided_slice %158 {offsets = [0, 0], sizes = [8, 32], strides = [1, 1]} : vector<8x128xf32> to vector<8x32xf32>
    %160 = arith.negf %159 : vector<8x32xf32>
    %161 = math.exp %160 : vector<8x32xf32>
    %cst_31 = arith.constant 1.000000e+00 : f32
    %162 = vector.broadcast %cst_31 : f32 to vector<8x32xf32>
    %163 = arith.addf %162, %161 : vector<8x32xf32>
    %164 = arith.divf %162, %163 : vector<8x32xf32>
    %165 = vector.extract_strided_slice %158 {offsets = [0, 32], sizes = [8, 32], strides = [1, 1]} : vector<8x128xf32> to vector<8x32xf32>
    %166 = arith.negf %165 : vector<8x32xf32>
    %167 = math.exp %166 : vector<8x32xf32>
    %cst_32 = arith.constant 1.000000e+00 : f32
    %168 = vector.broadcast %cst_32 : f32 to vector<8x32xf32>
    %169 = arith.addf %168, %167 : vector<8x32xf32>
    %170 = arith.divf %168, %169 : vector<8x32xf32>
    %171 = vector.extract_strided_slice %158 {offsets = [0, 64], sizes = [8, 32], strides = [1, 1]} : vector<8x128xf32> to vector<8x32xf32>
    %172 = math.tanh %171 : vector<8x32xf32>
    %173 = vector.extract_strided_slice %158 {offsets = [0, 96], sizes = [8, 32], strides = [1, 1]} : vector<8x128xf32> to vector<8x32xf32>
    %174 = arith.negf %173 : vector<8x32xf32>
    %175 = math.exp %174 : vector<8x32xf32>
    %cst_33 = arith.constant 1.000000e+00 : f32
    %176 = vector.broadcast %cst_33 : f32 to vector<8x32xf32>
    %177 = arith.addf %176, %175 : vector<8x32xf32>
    %178 = arith.divf %176, %177 : vector<8x32xf32>
    %179 = arith.mulf %170, %148 : vector<8x32xf32>
    %180 = arith.mulf %164, %172 : vector<8x32xf32>
    %181 = arith.addf %179, %180 : vector<8x32xf32>
    %182 = math.tanh %181 : vector<8x32xf32>
    %183 = arith.mulf %178, %182 : vector<8x32xf32>
    %cst_34 = arith.constant dense<0.000000e+00> : vector<8x256xf32>
    %184 = tpu.matmul %183, %13, %cst_34 {dimension_numbers = #tpu.dot_dimension_numbers<[1], [0], [0], [1], [0, 0, 1, 1], [], []>} : vector<8x32xf32>, vector<32x256xf32>, vector<8x256xf32> -> vector<8x256xf32>
    %185 = vector.extract_strided_slice %184 {offsets = [0, 0], sizes = [8, 128], strides = [1, 1]} : vector<8x256xf32> to vector<8x128xf32>
    %186 = vector.extract_strided_slice %184 {offsets = [0, 128], sizes = [8, 128], strides = [1, 1]} : vector<8x256xf32> to vector<8x128xf32>
    %187 = arith.select %16, %185, %186 : vector<8x128xi1>, vector<8x128xf32>
    %188 = vector.extract_strided_slice %12 {offsets = [20, 0], sizes = [4, 128], strides = [1, 1]} : vector<32x256xf32> to vector<4x128xf32>
    %189 = vector.extract_strided_slice %12 {offsets = [8, 128], sizes = [4, 128], strides = [1, 1]} : vector<32x256xf32> to vector<4x128xf32>
    %190 = tpu.concatenate %188, %189 in 0 : vector<4x128xf32>, vector<4x128xf32> -> vector<8x128xf32>
    %191 = arith.addf %187, %190 : vector<8x128xf32>
    %192 = vector.extract_strided_slice %191 {offsets = [0, 0], sizes = [8, 32], strides = [1, 1]} : vector<8x128xf32> to vector<8x32xf32>
    %193 = arith.negf %192 : vector<8x32xf32>
    %194 = math.exp %193 : vector<8x32xf32>
    %cst_35 = arith.constant 1.000000e+00 : f32
    %195 = vector.broadcast %cst_35 : f32 to vector<8x32xf32>
    %196 = arith.addf %195, %194 : vector<8x32xf32>
    %197 = arith.divf %195, %196 : vector<8x32xf32>
    %198 = vector.extract_strided_slice %191 {offsets = [0, 32], sizes = [8, 32], strides = [1, 1]} : vector<8x128xf32> to vector<8x32xf32>
    %199 = arith.negf %198 : vector<8x32xf32>
    %200 = math.exp %199 : vector<8x32xf32>
    %cst_36 = arith.constant 1.000000e+00 : f32
    %201 = vector.broadcast %cst_36 : f32 to vector<8x32xf32>
    %202 = arith.addf %201, %200 : vector<8x32xf32>
    %203 = arith.divf %201, %202 : vector<8x32xf32>
    %204 = vector.extract_strided_slice %191 {offsets = [0, 64], sizes = [8, 32], strides = [1, 1]} : vector<8x128xf32> to vector<8x32xf32>
    %205 = math.tanh %204 : vector<8x32xf32>
    %206 = vector.extract_strided_slice %191 {offsets = [0, 96], sizes = [8, 32], strides = [1, 1]} : vector<8x128xf32> to vector<8x32xf32>
    %207 = arith.negf %206 : vector<8x32xf32>
    %208 = math.exp %207 : vector<8x32xf32>
    %cst_37 = arith.constant 1.000000e+00 : f32
    %209 = vector.broadcast %cst_37 : f32 to vector<8x32xf32>
    %210 = arith.addf %209, %208 : vector<8x32xf32>
    %211 = arith.divf %209, %210 : vector<8x32xf32>
    %212 = arith.mulf %203, %181 : vector<8x32xf32>
    %213 = arith.mulf %197, %205 : vector<8x32xf32>
    %214 = arith.addf %212, %213 : vector<8x32xf32>
    %215 = math.tanh %214 : vector<8x32xf32>
    %216 = arith.mulf %211, %215 : vector<8x32xf32>
    %cst_38 = arith.constant dense<0.000000e+00> : vector<8x256xf32>
    %217 = tpu.matmul %216, %13, %cst_38 {dimension_numbers = #tpu.dot_dimension_numbers<[1], [0], [0], [1], [0, 0, 1, 1], [], []>} : vector<8x32xf32>, vector<32x256xf32>, vector<8x256xf32> -> vector<8x256xf32>
    %218 = vector.extract_strided_slice %217 {offsets = [0, 0], sizes = [8, 128], strides = [1, 1]} : vector<8x256xf32> to vector<8x128xf32>
    %219 = vector.extract_strided_slice %217 {offsets = [0, 128], sizes = [8, 128], strides = [1, 1]} : vector<8x256xf32> to vector<8x128xf32>
    %220 = arith.select %16, %218, %219 : vector<8x128xi1>, vector<8x128xf32>
    %221 = vector.extract_strided_slice %12 {offsets = [24, 0], sizes = [4, 128], strides = [1, 1]} : vector<32x256xf32> to vector<4x128xf32>
    %222 = vector.extract_strided_slice %12 {offsets = [4, 128], sizes = [4, 128], strides = [1, 1]} : vector<32x256xf32> to vector<4x128xf32>
    %223 = tpu.concatenate %221, %222 in 0 : vector<4x128xf32>, vector<4x128xf32> -> vector<8x128xf32>
    %224 = arith.addf %220, %223 : vector<8x128xf32>
    %225 = vector.extract_strided_slice %224 {offsets = [0, 0], sizes = [8, 32], strides = [1, 1]} : vector<8x128xf32> to vector<8x32xf32>
    %226 = arith.negf %225 : vector<8x32xf32>
    %227 = math.exp %226 : vector<8x32xf32>
    %cst_39 = arith.constant 1.000000e+00 : f32
    %228 = vector.broadcast %cst_39 : f32 to vector<8x32xf32>
    %229 = arith.addf %228, %227 : vector<8x32xf32>
    %230 = arith.divf %228, %229 : vector<8x32xf32>
    %231 = vector.extract_strided_slice %224 {offsets = [0, 32], sizes = [8, 32], strides = [1, 1]} : vector<8x128xf32> to vector<8x32xf32>
    %232 = arith.negf %231 : vector<8x32xf32>
    %233 = math.exp %232 : vector<8x32xf32>
    %cst_40 = arith.constant 1.000000e+00 : f32
    %234 = vector.broadcast %cst_40 : f32 to vector<8x32xf32>
    %235 = arith.addf %234, %233 : vector<8x32xf32>
    %236 = arith.divf %234, %235 : vector<8x32xf32>
    %237 = vector.extract_strided_slice %224 {offsets = [0, 64], sizes = [8, 32], strides = [1, 1]} : vector<8x128xf32> to vector<8x32xf32>
    %238 = math.tanh %237 : vector<8x32xf32>
    %239 = vector.extract_strided_slice %224 {offsets = [0, 96], sizes = [8, 32], strides = [1, 1]} : vector<8x128xf32> to vector<8x32xf32>
    %240 = arith.negf %239 : vector<8x32xf32>
    %241 = math.exp %240 : vector<8x32xf32>
    %cst_41 = arith.constant 1.000000e+00 : f32
    %242 = vector.broadcast %cst_41 : f32 to vector<8x32xf32>
    %243 = arith.addf %242, %241 : vector<8x32xf32>
    %244 = arith.divf %242, %243 : vector<8x32xf32>
    %245 = arith.mulf %236, %214 : vector<8x32xf32>
    %246 = arith.mulf %230, %238 : vector<8x32xf32>
    %247 = arith.addf %245, %246 : vector<8x32xf32>
    %248 = math.tanh %247 : vector<8x32xf32>
    %249 = arith.mulf %244, %248 : vector<8x32xf32>
    %cst_42 = arith.constant dense<0.000000e+00> : vector<8x256xf32>
    %250 = tpu.matmul %249, %13, %cst_42 {dimension_numbers = #tpu.dot_dimension_numbers<[1], [0], [0], [1], [0, 0, 1, 1], [], []>} : vector<8x32xf32>, vector<32x256xf32>, vector<8x256xf32> -> vector<8x256xf32>
    %251 = vector.extract_strided_slice %250 {offsets = [0, 0], sizes = [8, 128], strides = [1, 1]} : vector<8x256xf32> to vector<8x128xf32>
    %252 = vector.extract_strided_slice %250 {offsets = [0, 128], sizes = [8, 128], strides = [1, 1]} : vector<8x256xf32> to vector<8x128xf32>
    %253 = arith.select %16, %251, %252 : vector<8x128xi1>, vector<8x128xf32>
    %254 = vector.extract_strided_slice %12 {offsets = [28, 0], sizes = [4, 128], strides = [1, 1]} : vector<32x256xf32> to vector<4x128xf32>
    %255 = vector.extract_strided_slice %12 {offsets = [0, 128], sizes = [4, 128], strides = [1, 1]} : vector<32x256xf32> to vector<4x128xf32>
    %256 = tpu.concatenate %254, %255 in 0 : vector<4x128xf32>, vector<4x128xf32> -> vector<8x128xf32>
    %257 = arith.addf %253, %256 : vector<8x128xf32>
    %258 = vector.extract_strided_slice %257 {offsets = [0, 0], sizes = [8, 32], strides = [1, 1]} : vector<8x128xf32> to vector<8x32xf32>
    %259 = arith.negf %258 : vector<8x32xf32>
    %260 = math.exp %259 : vector<8x32xf32>
    %cst_43 = arith.constant 1.000000e+00 : f32
    %261 = vector.broadcast %cst_43 : f32 to vector<8x32xf32>
    %262 = arith.addf %261, %260 : vector<8x32xf32>
    %263 = arith.divf %261, %262 : vector<8x32xf32>
    %264 = vector.extract_strided_slice %257 {offsets = [0, 32], sizes = [8, 32], strides = [1, 1]} : vector<8x128xf32> to vector<8x32xf32>
    %265 = arith.negf %264 : vector<8x32xf32>
    %266 = math.exp %265 : vector<8x32xf32>
    %cst_44 = arith.constant 1.000000e+00 : f32
    %267 = vector.broadcast %cst_44 : f32 to vector<8x32xf32>
    %268 = arith.addf %267, %266 : vector<8x32xf32>
    %269 = arith.divf %267, %268 : vector<8x32xf32>
    %270 = vector.extract_strided_slice %257 {offsets = [0, 64], sizes = [8, 32], strides = [1, 1]} : vector<8x128xf32> to vector<8x32xf32>
    %271 = math.tanh %270 : vector<8x32xf32>
    %272 = vector.extract_strided_slice %257 {offsets = [0, 96], sizes = [8, 32], strides = [1, 1]} : vector<8x128xf32> to vector<8x32xf32>
    %273 = arith.negf %272 : vector<8x32xf32>
    %274 = math.exp %273 : vector<8x32xf32>
    %cst_45 = arith.constant 1.000000e+00 : f32
    %275 = vector.broadcast %cst_45 : f32 to vector<8x32xf32>
    %276 = arith.addf %275, %274 : vector<8x32xf32>
    %277 = arith.divf %275, %276 : vector<8x32xf32>
    %278 = arith.mulf %269, %247 : vector<8x32xf32>
    %279 = arith.mulf %263, %271 : vector<8x32xf32>
    %280 = arith.addf %278, %279 : vector<8x32xf32>
    %281 = math.tanh %280 : vector<8x32xf32>
    %282 = arith.mulf %277, %281 : vector<8x32xf32>
    %283 = arith.addf %282, %280 : vector<8x32xf32>
    %284 = arith.mulf %283, %283 : vector<8x32xf32>
    %285 = vector.shape_cast %284 : vector<8x32xf32> to vector<1x8x32xf32>
    %cst_46 = arith.constant dense<0.000000e+00> : vector<1xf32>
    %286 = vector.multi_reduction <add>, %285, %cst_46 [1, 2] : vector<1x8x32xf32> to vector<1xf32>
    %287 = vector.shape_cast %286 : vector<1xf32> to vector<1x1x1xf32>
    %288 = vector.extract %287[0, 0, 0] : f32 from vector<1x1x1xf32>
    %289 = vector.broadcast %288 : f32 to vector<1x1xf32>
    %290 = math.rsqrt %289 : vector<1x1xf32>
    %291 = vector.broadcast %290 : vector<1x1xf32> to vector<8x32xf32>
    %292 = arith.mulf %283, %291 : vector<8x32xf32>
    %293 = vector.extract_strided_slice %292 {offsets = [0, 0], sizes = [1, 32], strides = [1, 1]} : vector<8x32xf32> to vector<1x32xf32>
    %c0_47 = arith.constant 0 : index
    %c0_48 = arith.constant 0 : index
    %294 = vector.load %arg10[%c0_47, %c0_48] : memref<4x64xf32, #tpu.memory_space<vmem>>, vector<1x32xf32>
    tpu.vector_store %arg10[%c0_47, %c0_48], %293 {strides = array<i32>} : memref<4x64xf32, #tpu.memory_space<vmem>>, vector<1x32xf32>,
    %295 = vector.extract_strided_slice %292 {offsets = [1, 0], sizes = [1, 32], strides = [1, 1]} : vector<8x32xf32> to vector<1x32xf32>
    %c0_49 = arith.constant 0 : index
    %c32 = arith.constant 32 : index
    %296 = vector.load %arg10[%c0_49, %c32] : memref<4x64xf32, #tpu.memory_space<vmem>>, vector<1x32xf32>
    tpu.vector_store %arg10[%c0_49, %c32], %295 {strides = array<i32>} : memref<4x64xf32, #tpu.memory_space<vmem>>, vector<1x32xf32>,
    %297 = vector.extract_strided_slice %292 {offsets = [2, 0], sizes = [1, 32], strides = [1, 1]} : vector<8x32xf32> to vector<1x32xf32>
    %c1 = arith.constant 1 : index
    %c0_50 = arith.constant 0 : index
    %298 = vector.load %arg10[%c1, %c0_50] : memref<4x64xf32, #tpu.memory_space<vmem>>, vector<1x32xf32>
    tpu.vector_store %arg10[%c1, %c0_50], %297 {strides = array<i32>} : memref<4x64xf32, #tpu.memory_space<vmem>>, vector<1x32xf32>,
    %299 = vector.extract_strided_slice %292 {offsets = [3, 0], sizes = [1, 32], strides = [1, 1]} : vector<8x32xf32> to vector<1x32xf32>
    %c1_51 = arith.constant 1 : index
    %c32_52 = arith.constant 32 : index
    %300 = vector.load %arg10[%c1_51, %c32_52] : memref<4x64xf32, #tpu.memory_space<vmem>>, vector<1x32xf32>
    tpu.vector_store %arg10[%c1_51, %c32_52], %299 {strides = array<i32>} : memref<4x64xf32, #tpu.memory_space<vmem>>, vector<1x32xf32>,
    %301 = vector.extract_strided_slice %292 {offsets = [4, 0], sizes = [1, 32], strides = [1, 1]} : vector<8x32xf32> to vector<1x32xf32>
    %c2 = arith.constant 2 : index
    %c0_53 = arith.constant 0 : index
    %302 = vector.load %arg10[%c2, %c0_53] : memref<4x64xf32, #tpu.memory_space<vmem>>, vector<1x32xf32>
    tpu.vector_store %arg10[%c2, %c0_53], %301 {strides = array<i32>} : memref<4x64xf32, #tpu.memory_space<vmem>>, vector<1x32xf32>,
    %303 = vector.extract_strided_slice %292 {offsets = [5, 0], sizes = [1, 32], strides = [1, 1]} : vector<8x32xf32> to vector<1x32xf32>
    %c2_54 = arith.constant 2 : index
    %c32_55 = arith.constant 32 : index
    %304 = vector.load %arg10[%c2_54, %c32_55] : memref<4x64xf32, #tpu.memory_space<vmem>>, vector<1x32xf32>
    tpu.vector_store %arg10[%c2_54, %c32_55], %303 {strides = array<i32>} : memref<4x64xf32, #tpu.memory_space<vmem>>, vector<1x32xf32>,
    %305 = vector.extract_strided_slice %292 {offsets = [6, 0], sizes = [1, 32], strides = [1, 1]} : vector<8x32xf32> to vector<1x32xf32>
    %c3 = arith.constant 3 : index
    %c0_56 = arith.constant 0 : index
    %306 = vector.load %arg10[%c3, %c0_56] : memref<4x64xf32, #tpu.memory_space<vmem>>, vector<1x32xf32>
    tpu.vector_store %arg10[%c3, %c0_56], %305 {strides = array<i32>} : memref<4x64xf32, #tpu.memory_space<vmem>>, vector<1x32xf32>,
    %307 = vector.extract_strided_slice %292 {offsets = [7, 0], sizes = [1, 32], strides = [1, 1]} : vector<8x32xf32> to vector<1x32xf32>
    %c3_57 = arith.constant 3 : index
    %c32_58 = arith.constant 32 : index
    %308 = vector.load %arg10[%c3_57, %c32_58] : memref<4x64xf32, #tpu.memory_space<vmem>>, vector<1x32xf32>
    tpu.vector_store %arg10[%c3_57, %c32_58], %307 {strides = array<i32>} : memref<4x64xf32, #tpu.memory_space<vmem>>, vector<1x32xf32>,
    %c0_59 = arith.constant 0 : index
    %c0_60 = arith.constant 0 : index
    %309 = vector.load %arg10[%c0_59, %c0_60] : memref<4x64xf32, #tpu.memory_space<vmem>>, vector<4x64xf32>
    %c0_61 = arith.constant 0 : index
    %c0_62 = arith.constant 0 : index
    %310 = vector.load %arg7[%c0_61, %c0_62] : memref<64x16xf32, #tpu.memory_space<vmem>>, vector<64x16xf32>
    %cst_63 = arith.constant dense<0.000000e+00> : vector<4x16xf32>
    %311 = tpu.matmul %309, %310, %cst_63 {dimension_numbers = #tpu.dot_dimension_numbers<[1], [0], [0], [1], [0, 0, 1, 1], [], []>} : vector<4x64xf32>, vector<64x16xf32>, vector<4x16xf32> -> vector<4x16xf32>
    %c0_64 = arith.constant 0 : index
    %c0_65 = arith.constant 0 : index
    %312 = vector.load %arg8[%c0_64, %c0_65] : memref<1x16xf32, #tpu.memory_space<vmem>>, vector<1x16xf32>
    %313 = vector.broadcast %312 : vector<1x16xf32> to vector<4x16xf32>
    %314 = arith.addf %311, %313 : vector<4x16xf32>
    %cst_66 = arith.constant dense<0xFF800000> : vector<4xf32>
    %315 = vector.multi_reduction <maximumf>, %314, %cst_66 [1] : vector<4x16xf32> to vector<4xf32>
    %316 = vector.shape_cast %315 : vector<4xf32> to vector<4x1xf32>
    %317 = vector.broadcast %316 : vector<4x1xf32> to vector<4x16xf32>
    %318 = arith.subf %314, %317 : vector<4x16xf32>
    %319 = math.exp %318 : vector<4x16xf32>
    %cst_67 = arith.constant dense<0.000000e+00> : vector<4xf32>
    %320 = vector.multi_reduction <add>, %319, %cst_67 [1] : vector<4x16xf32> to vector<4xf32>
    %321 = vector.shape_cast %320 : vector<4xf32> to vector<4x1xf32>
    %322 = tpu.reciprocal %321 {approx = true} : vector<4x1xf32> -> vector<4x1xf32>
    %323 = vector.broadcast %322 : vector<4x1xf32> to vector<4x16xf32>
    %324 = arith.mulf %319, %323 : vector<4x16xf32>
    %c0_68 = arith.constant 0 : index
    %c0_69 = arith.constant 0 : index
    %325 = vector.load %arg9[%c0_68, %c0_69] : memref<4x16xf32, #tpu.memory_space<vmem>>, vector<4x16xf32>
    tpu.vector_store %arg9[%c0_68, %c0_69], %324 {strides = array<i32>} : memref<4x16xf32, #tpu.memory_space<vmem>>, vector<4x16xf32>,
    return
  }
}

</mosaic_0001>

<llo_original>
// kernel: doc2vec_forward.1
$region0: #{doc2vec_forward.1}
  #allocation0 [shape = 'u32[]', space=smem, size = 0x4, offset = 0x4, fixed_abs, tag = 'smem constant byte address 0x4 - core index']
  #allocation1 [shape = 'u32[144,128]{1,0:T(1,128)}', space=vmem, size = 0x12000, scoped, tag = 'internal scratch']
  #allocation2 [shape = 'f32[4,64]{1,0:T(4,128)}', space=vmem, size = 0x800, scoped, tag = 'scratch operand']
  %s0 = inlined_call_operand.vmem [shape: s32[32,1], index: 0, kind: input, shape index: {}]
  %s1 = inlined_call_operand.vmem [shape: f32[64,32], index: 1, kind: input, shape index: {}]
  %s2 = inlined_call_operand.vmem [shape: f32[32,256], index: 2, kind: input, shape index: {}]
  %s3 = inlined_call_operand.vmem [shape: f32[1,256], index: 3, kind: input, shape index: {}]
  %s4 = inlined_call_operand.vmem [shape: f32[32,256], index: 4, kind: input, shape index: {}]
  %s5 = inlined_call_operand.vmem [shape: f32[8,32], index: 5, kind: input, shape index: {}]
  %s6 = inlined_call_operand.vmem [shape: f32[8,32], index: 6, kind: input, shape index: {}]
  %s7 = inlined_call_operand.vmem [shape: f32[64,16], index: 7, kind: input, shape index: {}]
  %s8 = inlined_call_operand.vmem [shape: f32[1,16], index: 8, kind: input, shape index: {}]
  %s9 = inlined_call_operand.hbm [shape: f32[4,16], index: 9, kind: output, shape index: {}]
  %s10 = sld [smem:[#allocation0]]
  $region46: #{doc2vec_forward.1} parent=0
    _
  %s12 = ssub.s32 1, %s10
  %s13 = scalar_select 0, %s12, %s10
  $region1: #{doc2vec_forward.1} parent=0
    #allocation3 [shape = 'u8[2048]{0}', space=vmem, size = 0x800, scoped, tag = 'output window, operand 0, single buffered']
    #allocation4 [shape = 's32[1]{0}', space=sflag, size = 0x4, scoped, tag = 'scoped memory for doc2vec_forward.1']
    %14 = vsyncpa [#allocation4], 0
    // Predicated region
    $region2: #{doc2vec_forward.1} parent=1 // pred_check
      _
    $region3: #{doc2vec_forward.1} parent=1 // pred_check_branch
      %16 = sbr.rel (0) target = $region5
    $region4: #{doc2vec_forward.1} parent=1 // pred_region
      _
    $region5: #{doc2vec_forward.1} parent=1 // pred_fallthru
      _
    // Predicated region
    $region6: #{doc2vec_forward.1} parent=1 // pred_check
      _
    $region7: #{doc2vec_forward.1} parent=1 // pred_check_branch
      %18 = sbr.rel (0) target = $region9
    $region8: #{doc2vec_forward.1} parent=1 // pred_region
      _
    $region9: #{doc2vec_forward.1} parent=1 // pred_fallthru
      _
    // Predicated region
    $region10: #{doc2vec_forward.1} parent=1 // pred_check
      _
    $region11: #{doc2vec_forward.1} parent=1 // pred_check_branch
      %20 = sbr.rel (0) target = $region13
    $region12: #{doc2vec_forward.1} parent=1 // pred_region
      _
    $region13: #{doc2vec_forward.1} parent=1 // pred_fallthru
      _
    // Predicated region
    $region14: #{doc2vec_forward.1} parent=1 // pred_check
      _
    $region15: #{doc2vec_forward.1} parent=1 // pred_check_branch
      %22 = sbr.rel (0) target = $region17
    $region16: #{doc2vec_forward.1} parent=1 // pred_region
      _
    $region17: #{doc2vec_forward.1} parent=1 // pred_fallthru
      _
    // Predicated region
    $region18: #{doc2vec_forward.1} parent=1 // pred_check
      _
    $region19: #{doc2vec_forward.1} parent=1 // pred_check_branch
      %24 = sbr.rel (0) target = $region21
    $region20: #{doc2vec_forward.1} parent=1 // pred_region
      _
    $region21: #{doc2vec_forward.1} parent=1 // pred_fallthru
      _
    // Predicated region
    $region22: #{doc2vec_forward.1} parent=1 // pred_check
      _
    $region23: #{doc2vec_forward.1} parent=1 // pred_check_branch
      %26 = sbr.rel (0) target = $region25
    $region24: #{doc2vec_forward.1} parent=1 // pred_region
      _
    $region25: #{doc2vec_forward.1} parent=1 // pred_fallthru
      _
    // Predicated region
    $region26: #{doc2vec_forward.1} parent=1 // pred_check
      _
    $region27: #{doc2vec_forward.1} parent=1 // pred_check_branch
      %28 = sbr.rel (0) target = $region29
    $region28: #{doc2vec_forward.1} parent=1 // pred_region
      _
    $region29: #{doc2vec_forward.1} parent=1 // pred_fallthru
      _
    // Predicated region
    $region30: #{doc2vec_forward.1} parent=1 // pred_check
      _
    $region31: #{doc2vec_forward.1} parent=1 // pred_check_branch
      %30 = sbr.rel (0) target = $region33
    $region32: #{doc2vec_forward.1} parent=1 // pred_region
      _
    $region33: #{doc2vec_forward.1} parent=1 // pred_fallthru
      _
    // Predicated region
    $region34: #{doc2vec_forward.1} parent=1 // pred_check
      _
    $region35: #{doc2vec_forward.1} parent=1 // pred_check_branch
      %32 = sbr.rel (0) target = $region37
    $region36: #{doc2vec_forward.1} parent=1 // pred_region
      _
    $region37: #{doc2vec_forward.1} parent=1 // pred_fallthru
      _
    %v33 = vld [vmem:[%s0] sm:$0xff]
    %v34 = vld [vmem:[%s0 + $0x8] sm:$0xff]
    %v35 = vld [vmem:[%s0 + $0x10] sm:$0xff]
    %v36 = vld [vmem:[%s0 + $0x18] sm:$0xff]
    %v37 = vlaneseq
    %v38 = vand.u32 %v37, 127
    %39 = vset.pattern.permute.xlu0 0
    %40 = vperm.xlu0 %39, %v33
    %v41 = vpop.permute.xlu0 %40
    %42 = vset.pattern.permute.xlu0 0
    %43 = vperm.xlu0 %42, %v34
    %v44 = vpop.permute.xlu0 %43
    %45 = vset.pattern.permute.xlu0 0
    %46 = vperm.xlu0 %45, %v35
    %v47 = vpop.permute.xlu0 %46
    %48 = vset.pattern.permute.xlu0 0
    %49 = vperm.xlu0 %48, %v36
    %v50 = vpop.permute.xlu0 %49
    %vm51 = vcmp.eq.s32.totalorder %v38, %v41
    %vm52 = vcmp.eq.s32.totalorder %v38, %v44
    %vm53 = vcmp.eq.s32.totalorder %v38, %v47
    %vm54 = vcmp.eq.s32.totalorder %v38, %v50
    %v55 = vsel %vm51, 1, 0
    %v56 = vsel %vm52, 1, 0
    %v57 = vsel %vm53, 1, 0
    %v58 = vsel %vm54, 1, 0
    %v59 = vcvt.s32.f32 %v55
    %v60 = vcvt.s32.f32 %v56
    %v61 = vcvt.s32.f32 %v57
    %v62 = vcvt.s32.f32 %v58
    %v63 = vld [vmem:[%s1] sm:$0xff]
    %v64 = vld [vmem:[%s1 + $0x8] sm:$0xff]
    %v65 = vld [vmem:[%s1 + $0x10] sm:$0xff]
    %v66 = vld [vmem:[%s1 + $0x18] sm:$0xff]
    %v67 = vld [vmem:[%s1 + $0x20] sm:$0xff]
    %v68 = vld [vmem:[%s1 + $0x28] sm:$0xff]
    %v69 = vld [vmem:[%s1 + $0x30] sm:$0xff]
    %v70 = vld [vmem:[%s1 + $0x38] sm:$0xff]
    %vm71 = vcmask 523264
    %v73 = vsel %vm71, %v59, 0
    %v76 = vsel %vm71, %v60, 0
    %v79 = vsel %vm71, %v61, 0
    %v82 = vsel %vm71, %v62, 0
    %84 = vmatprep.subr.mxu0 0.0
    %85 = vmatpush1.msra.mxu0 %v63
    %86 = vmatprep.subr.mxu0 0.0
    %87 = vmatpush1.msra.mxu0 %v64
    %88 = vmatprep.subr.mxu0 0.0
    %89 = vmatpush1.msra.mxu0 %v65
    %90 = vmatprep.subr.mxu0 0.0
    %91 = vmatpush1.msra.mxu0 %v66
    %92 = vmatprep.subr.mxu0 0.0
    %93 = vmatpush1.msra.mxu0 %v67
    %94 = vmatprep.subr.mxu0 0.0
    %95 = vmatpush1.msra.mxu0 %v68
    %96 = vmatprep.subr.mxu0 0.0
    %97 = vmatpush1.msra.mxu0 %v69
    %98 = vmatprep.subr.mxu0 0.0
    %99 = vmatpush1.msra.mxu0 %v70
    %100 = vmatprep.subr.mxu0 0.0
    %101 = vmatpush1.msra.mxu0 0.0
    %102 = vmatprep.subr.mxu0 0.0
    %103 = vmatpush1.msra.mxu0 0.0
    %104 = vmatprep.subr.mxu0 0.0
    %105 = vmatpush1.msra.mxu0 0.0
    %106 = vmatprep.subr.mxu0 0.0
    %107 = vmatpush1.msra.mxu0 0.0
    %108 = vmatprep.subr.mxu0 0.0
    %109 = vmatpush1.msra.mxu0 0.0
    %110 = vmatprep.subr.mxu0 0.0
    %111 = vmatpush1.msra.mxu0 0.0
    %112 = vmatprep.subr.mxu0 0.0
    %113 = vmatpush1.msra.mxu0 0.0
    %114 = vmatprep.subr.mxu0 0.0
    %115 = vmatpush1.msra.mxu0 0.0
    %116 = vmatprep.subr.mxu0 0.0
    %117 = vmatpush1.msra.mxu0 0.0
    %118 = vmatprep.subr.mxu0 0.0
    %119 = vmatpush1.msra.mxu0 0.0
    %120 = vmatprep.subr.mxu0 0.0
    %121 = vmatpush1.msra.mxu0 0.0
    %122 = vmatprep.subr.mxu0 0.0
    %123 = vmatpush1.msra.mxu0 0.0
    %124 = vmatprep.subr.mxu0 0.0
    %125 = vmatpush1.msra.mxu0 0.0
    %126 = vmatprep.subr.mxu0 0.0
    %127 = vmatpush1.msra.mxu0 0.0
    %128 = vmatprep.subr.mxu0 0.0
    %129 = vmatpush1.msra.mxu0 0.0
    %130 = vmatprep.subr.mxu0 0.0
    %131 = vmatpush1.msra.mxu0 0.0
    %132 = vmatprep.subr.mxu0 0.0
    %133 = vmatpush1.msra.mxu0 0.0
    %134 = vmatprep.subr.mxu0 0.0
    %135 = vmatpush1.msra.mxu0 0.0
    %136 = vmatprep.subr.mxu0 0.0
    %137 = vmatpush1.msra.mxu0 0.0
    %138 = vmatprep.subr.mxu0 0.0
    %139 = vmatpush1.msra.mxu0 0.0
    %140 = vmatprep.subr.mxu0 0.0
    %141 = vmatpush1.msra.mxu0 0.0
    %142 = vmatprep.subr.mxu0 0.0
    %143 = vmatpush1.msra.mxu0 0.0
    %144 = vmatprep.subr.mxu0 0.0
    %145 = vmatpush1.msra.mxu0 0.0
    %146 = vmatprep.subr.mxu0 0.0
    %147 = vmatpush1.msra.mxu0 0.0
    %148 = vmatprep.mubr.f32.mxu0 0.0
    %149 = vmatmul.mubr.f32.gmra.mrb[0].mxu0 %v73
    %v150 = vpop.f32.mrb[0].mxu0
    %v151 = vadd.f32 0.0, %v150
    %v152 = vpop.f32.mrb[0].mxu0
    %153 = vmatprep.mubr.f32.mxu0 0.0
    %154 = vmatmul.mubr.f32.gmra.mrb[0].mxu0 %v76
    %v155 = vpop.f32.mrb[0].mxu0
    %v156 = vadd.f32 0.0, %v155
    %v157 = vpop.f32.mrb[0].mxu0
    %158 = vmatprep.mubr.f32.mxu0 0.0
    %159 = vmatmul.mubr.f32.gmra.mrb[0].mxu0 %v79
    %v160 = vpop.f32.mrb[0].mxu0
    %v161 = vadd.f32 0.0, %v160
    %v162 = vpop.f32.mrb[0].mxu0
    %163 = vmatprep.mubr.f32.mxu0 0.0
    %164 = vmatmul.mubr.f32.gmra.mrb[0].mxu0 %v82
    %v165 = vpop.f32.mrb[0].mxu0
    %v166 = vadd.f32 0.0, %v165
    %v167 = vpop.f32.mrb[0].mxu0
    %168 = vdwg.mxu0
    %v169 = vld [vmem:[%s2] sm:$0xff]
    %v170 = vld [vmem:[%s2 + $0x8] sm:$0xff]
    %v171 = vld [vmem:[%s2 + $0x10] sm:$0xff]
    %v172 = vld [vmem:[%s2 + $0x18] sm:$0xff]
    %v173 = vld [vmem:[%s2 + $0x20] sm:$0xff]
    %v174 = vld [vmem:[%s2 + $0x28] sm:$0xff]
    %v175 = vld [vmem:[%s2 + $0x30] sm:$0xff]
    %v176 = vld [vmem:[%s2 + $0x38] sm:$0xff]
    %v177 = vld [vmem:[%s3] sm:$0x3]
    %v179 = vlaneseq
    %v180 = vshrl.u32 %v179, 7
    %v181 = vsub.s32 0, %v180
    %v182 = vrot.slane %v177, %v181
    %v183 = vlaneseq
    %v184 = vshrl.u32 %v183, 7
    %v185 = vsub.s32 1, %v184
    %v186 = vrot.slane %v177, %v185
    %vm189 = vcmask 261120
    %v191 = vsel %vm189, %v151, 0
    %v194 = vsel %vm189, %v156, 0
    %v197 = vsel %vm189, %v161, 0
    %v200 = vsel %vm189, %v166, 0
    %202 = vmatprep.subr.mxu0 %v170
    %203 = vmatpush1.msra.mxu0 %v169
    %204 = vmatprep.subr.mxu0 %v172
    %205 = vmatpush1.msra.mxu0 %v171
    %206 = vmatprep.subr.mxu0 %v174
    %207 = vmatpush1.msra.mxu0 %v173
    %208 = vmatprep.subr.mxu0 %v176
    %209 = vmatpush1.msra.mxu0 %v175
    %210 = vmatprep.subr.mxu0 0.0
    %211 = vmatpush1.msra.mxu0 0.0
    %212 = vmatprep.subr.mxu0 0.0
    %213 = vmatpush1.msra.mxu0 0.0
    %214 = vmatprep.subr.mxu0 0.0
    %215 = vmatpush1.msra.mxu0 0.0
    %216 = vmatprep.subr.mxu0 0.0
    %217 = vmatpush1.msra.mxu0 0.0
    %218 = vmatprep.subr.mxu0 0.0
    %219 = vmatpush1.msra.mxu0 0.0
    %220 = vmatprep.subr.mxu0 0.0
    %221 = vmatpush1.msra.mxu0 0.0
    %222 = vmatprep.subr.mxu0 0.0
    %223 = vmatpush1.msra.mxu0 0.0
    %224 = vmatprep.subr.mxu0 0.0
    %225 = vmatpush1.msra.mxu0 0.0
    %226 = vmatprep.subr.mxu0 0.0
    %227 = vmatpush1.msra.mxu0 0.0
    %228 = vmatprep.subr.mxu0 0.0
    %229 = vmatpush1.msra.mxu0 0.0
    %230 = vmatprep.subr.mxu0 0.0
    %231 = vmatpush1.msra.mxu0 0.0
    %232 = vmatprep.subr.mxu0 0.0
    %233 = vmatpush1.msra.mxu0 0.0
    %234 = vmatprep.subr.mxu0 0.0
    %235 = vmatpush1.msra.mxu0 0.0
    %236 = vmatprep.subr.mxu0 0.0
    %237 = vmatpush1.msra.mxu0 0.0
    %238 = vmatprep.subr.mxu0 0.0
    %239 = vmatpush1.msra.mxu0 0.0
    %240 = vmatprep.subr.mxu0 0.0
    %241 = vmatpush1.msra.mxu0 0.0
    %242 = vmatprep.subr.mxu0 0.0
    %243 = vmatpush1.msra.mxu0 0.0
    %244 = vmatprep.subr.mxu0 0.0
    %245 = vmatpush1.msra.mxu0 0.0
    %246 = vmatprep.subr.mxu0 0.0
    %247 = vmatpush1.msra.mxu0 0.0
    %248 = vmatprep.subr.mxu0 0.0
    %249 = vmatpush1.msra.mxu0 0.0
    %250 = vmatprep.subr.mxu0 0.0
    %251 = vmatpush1.msra.mxu0 0.0
    %252 = vmatprep.subr.mxu0 0.0
    %253 = vmatpush1.msra.mxu0 0.0
    %254 = vmatprep.subr.mxu0 0.0
    %255 = vmatpush1.msra.mxu0 0.0
    %256 = vmatprep.subr.mxu0 0.0
    %257 = vmatpush1.msra.mxu0 0.0
    %258 = vmatprep.subr.mxu0 0.0
    %259 = vmatpush1.msra.mxu0 0.0
    %260 = vmatprep.subr.mxu0 0.0
    %261 = vmatpush1.msra.mxu0 0.0
    %262 = vmatprep.subr.mxu0 0.0
    %263 = vmatpush1.msra.mxu0 0.0
    %264 = vmatprep.subr.mxu0 0.0
    %265 = vmatpush1.msra.mxu0 0.0
    %266 = vmatprep.mubr.f32.mxu0 0.0
    %267 = vmatmul.mubr.f32.gmra.mrb[0].mxu0 %v191
    %v268 = vpop.f32.mrb[0].mxu0
    %v269 = vadd.f32 %v182, %v268
    %v270 = vpop.f32.mrb[0].mxu0
    %v271 = vadd.f32 %v186, %v270
    %272 = vmatprep.mubr.f32.mxu0 0.0
    %273 = vmatmul.mubr.f32.gmra.mrb[0].mxu0 %v194
    %v274 = vpop.f32.mrb[0].mxu0
    %v275 = vadd.f32 %v182, %v274
    %v276 = vpop.f32.mrb[0].mxu0
    %v277 = vadd.f32 %v186, %v276
    %278 = vmatprep.mubr.f32.mxu0 0.0
    %279 = vmatmul.mubr.f32.gmra.mrb[0].mxu0 %v197
    %v280 = vpop.f32.mrb[0].mxu0
    %v281 = vadd.f32 %v182, %v280
    %v282 = vpop.f32.mrb[0].mxu0
    %v283 = vadd.f32 %v186, %v282
    %284 = vmatprep.mubr.f32.mxu0 0.0
    %285 = vmatmul.mubr.f32.gmra.mrb[0].mxu0 %v200
    %v286 = vpop.f32.mrb[0].mxu0
    %v287 = vadd.f32 %v182, %v286
    %v288 = vpop.f32.mrb[0].mxu0
    %v289 = vadd.f32 %v186, %v288
    %290 = vdwg.mxu0
    %v291 = vld [vmem:[%s4] sm:$0xff]
    %v292 = vld [vmem:[%s4 + $0x8] sm:$0xff]
    %v293 = vld [vmem:[%s4 + $0x10] sm:$0xff]
    %v294 = vld [vmem:[%s4 + $0x18] sm:$0xff]
    %v295 = vld [vmem:[%s4 + $0x20] sm:$0xff]
    %v296 = vld [vmem:[%s4 + $0x28] sm:$0xff]
    %v297 = vld [vmem:[%s4 + $0x30] sm:$0xff]
    %v298 = vld [vmem:[%s4 + $0x38] sm:$0xff]
    %v299 = vlaneseq
    %v300 = vshrl.u32 %v299, 7
    %vm301 = vcmp.lt.s32.totalorder %v300, 4
    %v302 = vld [vmem:[%s5] sm:$0xff]
    %v303 = vld [vmem:[%s6] sm:$0xff]
    %v305 = vsel %vm189, %v302, 0
    %307 = vmatprep.subr.mxu0 %v292
    %308 = vmatpush1.msra.mxu0 %v291
    %309 = vmatprep.subr.mxu0 %v294
    %310 = vmatpush1.msra.mxu0 %v293
    %311 = vmatprep.subr.mxu0 %v296
    %312 = vmatpush1.msra.mxu0 %v295
    %313 = vmatprep.subr.mxu0 %v298
    %314 = vmatpush1.msra.mxu0 %v297
    %315 = vmatprep.subr.mxu0 0.0
    %316 = vmatpush1.msra.mxu0 0.0
    %317 = vmatprep.subr.mxu0 0.0
    %318 = vmatpush1.msra.mxu0 0.0
    %319 = vmatprep.subr.mxu0 0.0
    %320 = vmatpush1.msra.mxu0 0.0
    %321 = vmatprep.subr.mxu0 0.0
    %322 = vmatpush1.msra.mxu0 0.0
    %323 = vmatprep.subr.mxu0 0.0
    %324 = vmatpush1.msra.mxu0 0.0
    %325 = vmatprep.subr.mxu0 0.0
    %326 = vmatpush1.msra.mxu0 0.0
    %327 = vmatprep.subr.mxu0 0.0
    %328 = vmatpush1.msra.mxu0 0.0
    %329 = vmatprep.subr.mxu0 0.0
    %330 = vmatpush1.msra.mxu0 0.0
    %331 = vmatprep.subr.mxu0 0.0
    %332 = vmatpush1.msra.mxu0 0.0
    %333 = vmatprep.subr.mxu0 0.0
    %334 = vmatpush1.msra.mxu0 0.0
    %335 = vmatprep.subr.mxu0 0.0
    %336 = vmatpush1.msra.mxu0 0.0
    %337 = vmatprep.subr.mxu0 0.0
    %338 = vmatpush1.msra.mxu0 0.0
    %339 = vmatprep.subr.mxu0 0.0
    %340 = vmatpush1.msra.mxu0 0.0
    %341 = vmatprep.subr.mxu0 0.0
    %342 = vmatpush1.msra.mxu0 0.0
    %343 = vmatprep.subr.mxu0 0.0
    %344 = vmatpush1.msra.mxu0 0.0
    %345 = vmatprep.subr.mxu0 0.0
    %346 = vmatpush1.msra.mxu0 0.0
    %347 = vmatprep.subr.mxu0 0.0
    %348 = vmatpush1.msra.mxu0 0.0
    %349 = vmatprep.subr.mxu0 0.0
    %350 = vmatpush1.msra.mxu0 0.0
    %351 = vmatprep.subr.mxu0 0.0
    %352 = vmatpush1.msra.mxu0 0.0
    %353 = vmatprep.subr.mxu0 0.0
    %354 = vmatpush1.msra.mxu0 0.0
    %355 = vmatprep.subr.mxu0 0.0
    %356 = vmatpush1.msra.mxu0 0.0
    %357 = vmatprep.subr.mxu0 0.0
    %358 = vmatpush1.msra.mxu0 0.0
    %359 = vmatprep.subr.mxu0 0.0
    %360 = vmatpush1.msra.mxu0 0.0
    %361 = vmatprep.subr.mxu0 0.0
    %362 = vmatpush1.msra.mxu0 0.0
    %363 = vmatprep.subr.mxu0 0.0
    %364 = vmatpush1.msra.mxu0 0.0
    %365 = vmatprep.subr.mxu0 0.0
    %366 = vmatpush1.msra.mxu0 0.0
    %367 = vmatprep.subr.mxu0 0.0
    %368 = vmatpush1.msra.mxu0 0.0
    %369 = vmatprep.subr.mxu0 0.0
    %370 = vmatpush1.msra.mxu0 0.0
    %371 = vmatprep.mubr.f32.mxu0 0.0
    %372 = vmatmul.mubr.f32.gmra.mrb[0].mxu0 %v305
    %v373 = vpop.f32.mrb[0].mxu0
    %v374 = vadd.f32 0.0, %v373
    %v375 = vpop.f32.mrb[0].mxu0
    %v376 = vadd.f32 0.0, %v375
    %377 = vdwg.mxu0
    %v378 = vsel %vm301, %v374, %v376
    %vm379 = vcmask 1043456
    %v380 = vsel %vm379, %v269, %v289
    %v381 = vadd.f32 %v378, %v380
    %v382 = vxor.u32 %v381, 2147483648
    %v383 = vmul.f32 %v382, 1.442695
    %v384 = vpow.pop %v383
    %v385 = vadd.f32 %v384, 1.0
    %v386 = vrcp.pop %v385
    %v387 = vmul.f32 1.0, %v386
    %v388 = vtanh.pop %v381
    %390 = vrot.lane.b32.xlu0 %v303, 32
    %v391 = vpop.permute.xlu0 %390
    %v393 = vmul.f32 %v387, %v391
    %395 = vrot.lane.b32.xlu0 %v388, 64
    %v396 = vpop.permute.xlu0 %395
    %v398 = vmul.f32 %v387, %v396
    %400 = vrot.lane.b32.xlu0 %v398, 32
    %v401 = vpop.permute.xlu0 %400
    %v403 = vadd.f32 %v393, %v401
    %v404 = vtanh.pop %v403
    %406 = vrot.lane.b32.xlu0 %v404, 64
    %v407 = vpop.permute.xlu0 %406
    %v409 = vmul.f32 %v387, %v407
    %411 = vrot.lane.b32.xlu0 %v409, 32
    %v412 = vpop.permute.xlu0 %411
    %v413 = vsel %vm189, %v412, 0
    %415 = vmatprep.subr.mxu0 %v292
    %416 = vmatpush1.msra.mxu0 %v291
    %417 = vmatprep.subr.mxu0 %v294
    %418 = vmatpush1.msra.mxu0 %v293
    %419 = vmatprep.subr.mxu0 %v296
    %420 = vmatpush1.msra.mxu0 %v295
    %421 = vmatprep.subr.mxu0 %v298
    %422 = vmatpush1.msra.mxu0 %v297
    %423 = vmatprep.subr.mxu0 0.0
    %424 = vmatpush1.msra.mxu0 0.0
    %425 = vmatprep.subr.mxu0 0.0
    %426 = vmatpush1.msra.mxu0 0.0
    %427 = vmatprep.subr.mxu0 0.0
    %428 = vmatpush1.msra.mxu0 0.0
    %429 = vmatprep.subr.mxu0 0.0
    %430 = vmatpush1.msra.mxu0 0.0
    %431 = vmatprep.subr.mxu0 0.0
    %432 = vmatpush1.msra.mxu0 0.0
    %433 = vmatprep.subr.mxu0 0.0
    %434 = vmatpush1.msra.mxu0 0.0
    %435 = vmatprep.subr.mxu0 0.0
    %436 = vmatpush1.msra.mxu0 0.0
    %437 = vmatprep.subr.mxu0 0.0
    %438 = vmatpush1.msra.mxu0 0.0
    %439 = vmatprep.subr.mxu0 0.0
    %440 = vmatpush1.msra.mxu0 0.0
    %441 = vmatprep.subr.mxu0 0.0
    %442 = vmatpush1.msra.mxu0 0.0
    %443 = vmatprep.subr.mxu0 0.0
    %444 = vmatpush1.msra.mxu0 0.0
    %445 = vmatprep.subr.mxu0 0.0
    %446 = vmatpush1.msra.mxu0 0.0
    %447 = vmatprep.subr.mxu0 0.0
    %448 = vmatpush1.msra.mxu0 0.0
    %449 = vmatprep.subr.mxu0 0.0
    %450 = vmatpush1.msra.mxu0 0.0
    %451 = vmatprep.subr.mxu0 0.0
    %452 = vmatpush1.msra.mxu0 0.0
    %453 = vmatprep.subr.mxu0 0.0
    %454 = vmatpush1.msra.mxu0 0.0
    %455 = vmatprep.subr.mxu0 0.0
    %456 = vmatpush1.msra.mxu0 0.0
    %457 = vmatprep.subr.mxu0 0.0
    %458 = vmatpush1.msra.mxu0 0.0
    %459 = vmatprep.subr.mxu0 0.0
    %460 = vmatpush1.msra.mxu0 0.0
    %461 = vmatprep.subr.mxu0 0.0
    %462 = vmatpush1.msra.mxu0 0.0
    %463 = vmatprep.subr.mxu0 0.0
    %464 = vmatpush1.msra.mxu0 0.0
    %465 = vmatprep.subr.mxu0 0.0
    %466 = vmatpush1.msra.mxu0 0.0
    %467 = vmatprep.subr.mxu0 0.0
    %468 = vmatpush1.msra.mxu0 0.0
    %469 = vmatprep.subr.mxu0 0.0
    %470 = vmatpush1.msra.mxu0 0.0
    %471 = vmatprep.subr.mxu0 0.0
    %472 = vmatpush1.msra.mxu0 0.0
    %473 = vmatprep.subr.mxu0 0.0
    %474 = vmatpush1.msra.mxu0 0.0
    %475 = vmatprep.subr.mxu0 0.0
    %476 = vmatpush1.msra.mxu0 0.0
    %477 = vmatprep.subr.mxu0 0.0
    %478 = vmatpush1.msra.mxu0 0.0
    %479 = vmatprep.mubr.f32.mxu0 0.0
    %480 = vmatmul.mubr.f32.gmra.mrb[0].mxu0 %v413
    %v481 = vpop.f32.mrb[0].mxu0
    %v482 = vadd.f32 0.0, %v481
    %v483 = vpop.f32.mrb[0].mxu0
    %v484 = vadd.f32 0.0, %v483
    %485 = vdwg.mxu0
    %v486 = vsel %vm301, %v482, %v484
    %v488 = vrot.slane %v269, 4
    %v491 = vrot.slane %v289, 4
    %v493 = vsel %vm379, %v488, %v491
    %v494 = vadd.f32 %v486, %v493
    %v495 = vxor.u32 %v494, 2147483648
    %v496 = vmul.f32 %v495, 1.442695
    %v497 = vpow.pop %v496
    %v498 = vadd.f32 %v497, 1.0
    %v499 = vrcp.pop %v498
    %v500 = vmul.f32 1.0, %v499
    %v501 = vtanh.pop %v494
    %v502 = vmul.f32 %v500, %v403
    %504 = vrot.lane.b32.xlu0 %v501, 64
    %v505 = vpop.permute.xlu0 %504
    %v507 = vmul.f32 %v500, %v505
    %509 = vrot.lane.b32.xlu0 %v507, 32
    %v510 = vpop.permute.xlu0 %509
    %v512 = vadd.f32 %v502, %v510
    %v513 = vtanh.pop %v512
    %515 = vrot.lane.b32.xlu0 %v513, 64
    %v516 = vpop.permute.xlu0 %515
    %v518 = vmul.f32 %v500, %v516
    %520 = vrot.lane.b32.xlu0 %v518, 32
    %v521 = vpop.permute.xlu0 %520
    %v522 = vsel %vm189, %v521, 0
    %524 = vmatprep.subr.mxu0 %v292
    %525 = vmatpush1.msra.mxu0 %v291
    %526 = vmatprep.subr.mxu0 %v294
    %527 = vmatpush1.msra.mxu0 %v293
    %528 = vmatprep.subr.mxu0 %v296
    %529 = vmatpush1.msra.mxu0 %v295
    %530 = vmatprep.subr.mxu0 %v298
    %531 = vmatpush1.msra.mxu0 %v297
    %532 = vmatprep.subr.mxu0 0.0
    %533 = vmatpush1.msra.mxu0 0.0
    %534 = vmatprep.subr.mxu0 0.0
    %535 = vmatpush1.msra.mxu0 0.0
    %536 = vmatprep.subr.mxu0 0.0
    %537 = vmatpush1.msra.mxu0 0.0
    %538 = vmatprep.subr.mxu0 0.0
    %539 = vmatpush1.msra.mxu0 0.0
    %540 = vmatprep.subr.mxu0 0.0
    %541 = vmatpush1.msra.mxu0 0.0
    %542 = vmatprep.subr.mxu0 0.0
    %543 = vmatpush1.msra.mxu0 0.0
    %544 = vmatprep.subr.mxu0 0.0
    %545 = vmatpush1.msra.mxu0 0.0
    %546 = vmatprep.subr.mxu0 0.0
    %547 = vmatpush1.msra.mxu0 0.0
    %548 = vmatprep.subr.mxu0 0.0
    %549 = vmatpush1.msra.mxu0 0.0
    %550 = vmatprep.subr.mxu0 0.0
    %551 = vmatpush1.msra.mxu0 0.0
    %552 = vmatprep.subr.mxu0 0.0
    %553 = vmatpush1.msra.mxu0 0.0
    %554 = vmatprep.subr.mxu0 0.0
    %555 = vmatpush1.msra.mxu0 0.0
    %556 = vmatprep.subr.mxu0 0.0
    %557 = vmatpush1.msra.mxu0 0.0
    %558 = vmatprep.subr.mxu0 0.0
    %559 = vmatpush1.msra.mxu0 0.0
    %560 = vmatprep.subr.mxu0 0.0
    %561 = vmatpush1.msra.mxu0 0.0
    %562 = vmatprep.subr.mxu0 0.0
    %563 = vmatpush1.msra.mxu0 0.0
    %564 = vmatprep.subr.mxu0 0.0
    %565 = vmatpush1.msra.mxu0 0.0
    %566 = vmatprep.subr.mxu0 0.0
    %567 = vmatpush1.msra.mxu0 0.0
    %568 = vmatprep.subr.mxu0 0.0
    %569 = vmatpush1.msra.mxu0 0.0
    %570 = vmatprep.subr.mxu0 0.0
    %571 = vmatpush1.msra.mxu0 0.0
    %572 = vmatprep.subr.mxu0 0.0
    %573 = vmatpush1.msra.mxu0 0.0
    %574 = vmatprep.subr.mxu0 0.0
    %575 = vmatpush1.msra.mxu0 0.0
    %576 = vmatprep.subr.mxu0 0.0
    %577 = vmatpush1.msra.mxu0 0.0
    %578 = vmatprep.subr.mxu0 0.0
    %579 = vmatpush1.msra.mxu0 0.0
    %580 = vmatprep.subr.mxu0 0.0
    %581 = vmatpush1.msra.mxu0 0.0
    %582 = vmatprep.subr.mxu0 0.0
    %583 = vmatpush1.msra.mxu0 0.0
    %584 = vmatprep.subr.mxu0 0.0
    %585 = vmatpush1.msra.mxu0 0.0
    %586 = vmatprep.subr.mxu0 0.0
    %587 = vmatpush1.msra.mxu0 0.0
    %588 = vmatprep.mubr.f32.mxu0 0.0
    %589 = vmatmul.mubr.f32.gmra.mrb[0].mxu0 %v522
    %v590 = vpop.f32.mrb[0].mxu0
    %v591 = vadd.f32 0.0, %v590
    %v592 = vpop.f32.mrb[0].mxu0
    %v593 = vadd.f32 0.0, %v592
    %594 = vdwg.mxu0
    %v595 = vsel %vm301, %v591, %v593
    %v596 = vsel %vm379, %v275, %v283
    %v597 = vadd.f32 %v595, %v596
    %v598 = vxor.u32 %v597, 2147483648
    %v599 = vmul.f32 %v598, 1.442695
    %v600 = vpow.pop %v599
    %v601 = vadd.f32 %v600, 1.0
    %v602 = vrcp.pop %v601
    %v603 = vmul.f32 1.0, %v602
    %v604 = vtanh.pop %v597
    %v605 = vmul.f32 %v603, %v512
    %607 = vrot.lane.b32.xlu0 %v604, 64
    %v608 = vpop.permute.xlu0 %607
    %v610 = vmul.f32 %v603, %v608
    %612 = vrot.lane.b32.xlu0 %v610, 32
    %v613 = vpop.permute.xlu0 %612
    %v615 = vadd.f32 %v605, %v613
    %v616 = vtanh.pop %v615
    %618 = vrot.lane.b32.xlu0 %v616, 64
    %v619 = vpop.permute.xlu0 %618
    %v621 = vmul.f32 %v603, %v619
    %623 = vrot.lane.b32.xlu0 %v621, 32
    %v624 = vpop.permute.xlu0 %623
    %v625 = vsel %vm189, %v624, 0
    %627 = vmatprep.subr.mxu0 %v292
    %628 = vmatpush1.msra.mxu0 %v291
    %629 = vmatprep.subr.mxu0 %v294
    %630 = vmatpush1.msra.mxu0 %v293
    %631 = vmatprep.subr.mxu0 %v296
    %632 = vmatpush1.msra.mxu0 %v295
    %633 = vmatprep.subr.mxu0 %v298
    %634 = vmatpush1.msra.mxu0 %v297
    %635 = vmatprep.subr.mxu0 0.0
    %636 = vmatpush1.msra.mxu0 0.0
    %637 = vmatprep.subr.mxu0 0.0
    %638 = vmatpush1.msra.mxu0 0.0
    %639 = vmatprep.subr.mxu0 0.0
    %640 = vmatpush1.msra.mxu0 0.0
    %641 = vmatprep.subr.mxu0 0.0
    %642 = vmatpush1.msra.mxu0 0.0
    %643 = vmatprep.subr.mxu0 0.0
    %644 = vmatpush1.msra.mxu0 0.0
    %645 = vmatprep.subr.mxu0 0.0
    %646 = vmatpush1.msra.mxu0 0.0
    %647 = vmatprep.subr.mxu0 0.0
    %648 = vmatpush1.msra.mxu0 0.0
    %649 = vmatprep.subr.mxu0 0.0
    %650 = vmatpush1.msra.mxu0 0.0
    %651 = vmatprep.subr.mxu0 0.0
    %652 = vmatpush1.msra.mxu0 0.0
    %653 = vmatprep.subr.mxu0 0.0
    %654 = vmatpush1.msra.mxu0 0.0
    %655 = vmatprep.subr.mxu0 0.0
    %656 = vmatpush1.msra.mxu0 0.0
    %657 = vmatprep.subr.mxu0 0.0
    %658 = vmatpush1.msra.mxu0 0.0
    %659 = vmatprep.subr.mxu0 0.0
    %660 = vmatpush1.msra.mxu0 0.0
    %661 = vmatprep.subr.mxu0 0.0
    %662 = vmatpush1.msra.mxu0 0.0
    %663 = vmatprep.subr.mxu0 0.0
    %664 = vmatpush1.msra.mxu0 0.0
    %665 = vmatprep.subr.mxu0 0.0
    %666 = vmatpush1.msra.mxu0 0.0
    %667 = vmatprep.subr.mxu0 0.0
    %668 = vmatpush1.msra.mxu0 0.0
    %669 = vmatprep.subr.mxu0 0.0
    %670 = vmatpush1.msra.mxu0 0.0
    %671 = vmatprep.subr.mxu0 0.0
    %672 = vmatpush1.msra.mxu0 0.0
    %673 = vmatprep.subr.mxu0 0.0
    %674 = vmatpush1.msra.mxu0 0.0
    %675 = vmatprep.subr.mxu0 0.0
    %676 = vmatpush1.msra.mxu0 0.0
    %677 = vmatprep.subr.mxu0 0.0
    %678 = vmatpush1.msra.mxu0 0.0
    %679 = vmatprep.subr.mxu0 0.0
    %680 = vmatpush1.msra.mxu0 0.0
    %681 = vmatprep.subr.mxu0 0.0
    %682 = vmatpush1.msra.mxu0 0.0
    %683 = vmatprep.subr.mxu0 0.0
    %684 = vmatpush1.msra.mxu0 0.0
    %685 = vmatprep.subr.mxu0 0.0
    %686 = vmatpush1.msra.mxu0 0.0
    %687 = vmatprep.subr.mxu0 0.0
    %688 = vmatpush1.msra.mxu0 0.0
    %689 = vmatprep.subr.mxu0 0.0
    %690 = vmatpush1.msra.mxu0 0.0
    %691 = vmatprep.mubr.f32.mxu0 0.0
    %692 = vmatmul.mubr.f32.gmra.mrb[0].mxu0 %v625
    %v693 = vpop.f32.mrb[0].mxu0
    %v694 = vadd.f32 0.0, %v693
    %v695 = vpop.f32.mrb[0].mxu0
    %v696 = vadd.f32 0.0, %v695
    %697 = vdwg.mxu0
    %v698 = vsel %vm301, %v694, %v696
    %v700 = vrot.slane %v275, 4
    %v703 = vrot.slane %v283, 4
    %v705 = vsel %vm379, %v700, %v703
    %v706 = vadd.f32 %v698, %v705
    %v707 = vxor.u32 %v706, 2147483648
    %v708 = vmul.f32 %v707, 1.442695
    %v709 = vpow.pop %v708
    %v710 = vadd.f32 %v709, 1.0
    %v711 = vrcp.pop %v710
    %v712 = vmul.f32 1.0, %v711
    %v713 = vtanh.pop %v706
    %v714 = vmul.f32 %v712, %v615
    %716 = vrot.lane.b32.xlu0 %v713, 64
    %v717 = vpop.permute.xlu0 %716
    %v719 = vmul.f32 %v712, %v717
    %721 = vrot.lane.b32.xlu0 %v719, 32
    %v722 = vpop.permute.xlu0 %721
    %v724 = vadd.f32 %v714, %v722
    %v725 = vtanh.pop %v724
    %727 = vrot.lane.b32.xlu0 %v725, 64
    %v728 = vpop.permute.xlu0 %727
    %v730 = vmul.f32 %v712, %v728
    %732 = vrot.lane.b32.xlu0 %v730, 32
    %v733 = vpop.permute.xlu0 %732
    %v734 = vsel %vm189, %v733, 0
    %736 = vmatprep.subr.mxu0 %v292
    %737 = vmatpush1.msra.mxu0 %v291
    %738 = vmatprep.subr.mxu0 %v294
    %739 = vmatpush1.msra.mxu0 %v293
    %740 = vmatprep.subr.mxu0 %v296
    %741 = vmatpush1.msra.mxu0 %v295
    %742 = vmatprep.subr.mxu0 %v298
    %743 = vmatpush1.msra.mxu0 %v297
    %744 = vmatprep.subr.mxu0 0.0
    %745 = vmatpush1.msra.mxu0 0.0
    %746 = vmatprep.subr.mxu0 0.0
    %747 = vmatpush1.msra.mxu0 0.0
    %748 = vmatprep.subr.mxu0 0.0
    %749 = vmatpush1.msra.mxu0 0.0
    %750 = vmatprep.subr.mxu0 0.0
    %751 = vmatpush1.msra.mxu0 0.0
    %752 = vmatprep.subr.mxu0 0.0
    %753 = vmatpush1.msra.mxu0 0.0
    %754 = vmatprep.subr.mxu0 0.0
    %755 = vmatpush1.msra.mxu0 0.0
    %756 = vmatprep.subr.mxu0 0.0
    %757 = vmatpush1.msra.mxu0 0.0
    %758 = vmatprep.subr.mxu0 0.0
    %759 = vmatpush1.msra.mxu0 0.0
    %760 = vmatprep.subr.mxu0 0.0
    %761 = vmatpush1.msra.mxu0 0.0
    %762 = vmatprep.subr.mxu0 0.0
    %763 = vmatpush1.msra.mxu0 0.0
    %764 = vmatprep.subr.mxu0 0.0
    %765 = vmatpush1.msra.mxu0 0.0
    %766 = vmatprep.subr.mxu0 0.0
    %767 = vmatpush1.msra.mxu0 0.0
    %768 = vmatprep.subr.mxu0 0.0
    %769 = vmatpush1.msra.mxu0 0.0
    %770 = vmatprep.subr.mxu0 0.0
    %771 = vmatpush1.msra.mxu0 0.0
    %772 = vmatprep.subr.mxu0 0.0
    %773 = vmatpush1.msra.mxu0 0.0
    %774 = vmatprep.subr.mxu0 0.0
    %775 = vmatpush1.msra.mxu0 0.0
    %776 = vmatprep.subr.mxu0 0.0
    %777 = vmatpush1.msra.mxu0 0.0
    %778 = vmatprep.subr.mxu0 0.0
    %779 = vmatpush1.msra.mxu0 0.0
    %780 = vmatprep.subr.mxu0 0.0
    %781 = vmatpush1.msra.mxu0 0.0
    %782 = vmatprep.subr.mxu0 0.0
    %783 = vmatpush1.msra.mxu0 0.0
    %784 = vmatprep.subr.mxu0 0.0
    %785 = vmatpush1.msra.mxu0 0.0
    %786 = vmatprep.subr.mxu0 0.0
    %787 = vmatpush1.msra.mxu0 0.0
    %788 = vmatprep.subr.mxu0 0.0
    %789 = vmatpush1.msra.mxu0 0.0
    %790 = vmatprep.subr.mxu0 0.0
    %791 = vmatpush1.msra.mxu0 0.0
    %792 = vmatprep.subr.mxu0 0.0
    %793 = vmatpush1.msra.mxu0 0.0
    %794 = vmatprep.subr.mxu0 0.0
    %795 = vmatpush1.msra.mxu0 0.0
    %796 = vmatprep.subr.mxu0 0.0
    %797 = vmatpush1.msra.mxu0 0.0
    %798 = vmatprep.subr.mxu0 0.0
    %799 = vmatpush1.msra.mxu0 0.0
    %800 = vmatprep.mubr.f32.mxu0 0.0
    %801 = vmatmul.mubr.f32.gmra.mrb[0].mxu0 %v734
    %v802 = vpop.f32.mrb[0].mxu0
    %v803 = vadd.f32 0.0, %v802
    %v804 = vpop.f32.mrb[0].mxu0
    %v805 = vadd.f32 0.0, %v804
    %806 = vdwg.mxu0
    %v807 = vsel %vm301, %v803, %v805
    %v808 = vsel %vm379, %v281, %v277
    %v809 = vadd.f32 %v807, %v808
    %v810 = vxor.u32 %v809, 2147483648
    %v811 = vmul.f32 %v810, 1.442695
    %v812 = vpow.pop %v811
    %v813 = vadd.f32 %v812, 1.0
    %v814 = vrcp.pop %v813
    %v815 = vmul.f32 1.0, %v814
    %v816 = vtanh.pop %v809
    %v817 = vmul.f32 %v815, %v724
    %819 = vrot.lane.b32.xlu0 %v816, 64
    %v820 = vpop.permute.xlu0 %819
    %v822 = vmul.f32 %v815, %v820
    %824 = vrot.lane.b32.xlu0 %v822, 32
    %v825 = vpop.permute.xlu0 %824
    %v827 = vadd.f32 %v817, %v825
    %v828 = vtanh.pop %v827
    %830 = vrot.lane.b32.xlu0 %v828, 64
    %v831 = vpop.permute.xlu0 %830
    %v833 = vmul.f32 %v815, %v831
    %835 = vrot.lane.b32.xlu0 %v833, 32
    %v836 = vpop.permute.xlu0 %835
    %v837 = vsel %vm189, %v836, 0
    %839 = vmatprep.subr.mxu0 %v292
    %840 = vmatpush1.msra.mxu0 %v291
    %841 = vmatprep.subr.mxu0 %v294
    %842 = vmatpush1.msra.mxu0 %v293
    %843 = vmatprep.subr.mxu0 %v296
    %844 = vmatpush1.msra.mxu0 %v295
    %845 = vmatprep.subr.mxu0 %v298
    %846 = vmatpush1.msra.mxu0 %v297
    %847 = vmatprep.subr.mxu0 0.0
    %848 = vmatpush1.msra.mxu0 0.0
    %849 = vmatprep.subr.mxu0 0.0
    %850 = vmatpush1.msra.mxu0 0.0
    %851 = vmatprep.subr.mxu0 0.0
    %852 = vmatpush1.msra.mxu0 0.0
    %853 = vmatprep.subr.mxu0 0.0
    %854 = vmatpush1.msra.mxu0 0.0
    %855 = vmatprep.subr.mxu0 0.0
    %856 = vmatpush1.msra.mxu0 0.0
    %857 = vmatprep.subr.mxu0 0.0
    %858 = vmatpush1.msra.mxu0 0.0
    %859 = vmatprep.subr.mxu0 0.0
    %860 = vmatpush1.msra.mxu0 0.0
    %861 = vmatprep.subr.mxu0 0.0
    %862 = vmatpush1.msra.mxu0 0.0
    %863 = vmatprep.subr.mxu0 0.0
    %864 = vmatpush1.msra.mxu0 0.0
    %865 = vmatprep.subr.mxu0 0.0
    %866 = vmatpush1.msra.mxu0 0.0
    %867 = vmatprep.subr.mxu0 0.0
    %868 = vmatpush1.msra.mxu0 0.0
    %869 = vmatprep.subr.mxu0 0.0
    %870 = vmatpush1.msra.mxu0 0.0
    %871 = vmatprep.subr.mxu0 0.0
    %872 = vmatpush1.msra.mxu0 0.0
    %873 = vmatprep.subr.mxu0 0.0
    %874 = vmatpush1.msra.mxu0 0.0
    %875 = vmatprep.subr.mxu0 0.0
    %876 = vmatpush1.msra.mxu0 0.0
    %877 = vmatprep.subr.mxu0 0.0
    %878 = vmatpush1.msra.mxu0 0.0
    %879 = vmatprep.subr.mxu0 0.0
    %880 = vmatpush1.msra.mxu0 0.0
    %881 = vmatprep.subr.mxu0 0.0
    %882 = vmatpush1.msra.mxu0 0.0
    %883 = vmatprep.subr.mxu0 0.0
    %884 = vmatpush1.msra.mxu0 0.0
    %885 = vmatprep.subr.mxu0 0.0
    %886 = vmatpush1.msra.mxu0 0.0
    %887 = vmatprep.subr.mxu0 0.0
    %888 = vmatpush1.msra.mxu0 0.0
    %889 = vmatprep.subr.mxu0 0.0
    %890 = vmatpush1.msra.mxu0 0.0
    %891 = vmatprep.subr.mxu0 0.0
    %892 = vmatpush1.msra.mxu0 0.0
    %893 = vmatprep.subr.mxu0 0.0
    %894 = vmatpush1.msra.mxu0 0.0
    %895 = vmatprep.subr.mxu0 0.0
    %896 = vmatpush1.msra.mxu0 0.0
    %897 = vmatprep.subr.mxu0 0.0
    %898 = vmatpush1.msra.mxu0 0.0
    %899 = vmatprep.subr.mxu0 0.0
    %900 = vmatpush1.msra.mxu0 0.0
    %901 = vmatprep.subr.mxu0 0.0
    %902 = vmatpush1.msra.mxu0 0.0
    %903 = vmatprep.mubr.f32.mxu0 0.0
    %904 = vmatmul.mubr.f32.gmra.mrb[0].mxu0 %v837
    %v905 = vpop.f32.mrb[0].mxu0
    %v906 = vadd.f32 0.0, %v905
    %v907 = vpop.f32.mrb[0].mxu0
    %v908 = vadd.f32 0.0, %v907
    %909 = vdwg.mxu0
    %v910 = vsel %vm301, %v906, %v908
    %v912 = vrot.slane %v281, 4
    %v915 = vrot.slane %v277, 4
    %v917 = vsel %vm379, %v912, %v915
    %v918 = vadd.f32 %v910, %v917
    %v919 = vxor.u32 %v918, 2147483648
    %v920 = vmul.f32 %v919, 1.442695
    %v921 = vpow.pop %v920
    %v922 = vadd.f32 %v921, 1.0
    %v923 = vrcp.pop %v922
    %v924 = vmul.f32 1.0, %v923
    %v925 = vtanh.pop %v918
    %v926 = vmul.f32 %v924, %v827
    %928 = vrot.lane.b32.xlu0 %v925, 64
    %v929 = vpop.permute.xlu0 %928
    %v931 = vmul.f32 %v924, %v929
    %933 = vrot.lane.b32.xlu0 %v931, 32
    %v934 = vpop.permute.xlu0 %933
    %v936 = vadd.f32 %v926, %v934
    %v937 = vtanh.pop %v936
    %939 = vrot.lane.b32.xlu0 %v937, 64
    %v940 = vpop.permute.xlu0 %939
    %v942 = vmul.f32 %v924, %v940
    %944 = vrot.lane.b32.xlu0 %v942, 32
    %v945 = vpop.permute.xlu0 %944
    %v946 = vsel %vm189, %v945, 0
    %948 = vmatprep.subr.mxu0 %v292
    %949 = vmatpush1.msra.mxu0 %v291
    %950 = vmatprep.subr.mxu0 %v294
    %951 = vmatpush1.msra.mxu0 %v293
    %952 = vmatprep.subr.mxu0 %v296
    %953 = vmatpush1.msra.mxu0 %v295
    %954 = vmatprep.subr.mxu0 %v298
    %955 = vmatpush1.msra.mxu0 %v297
    %956 = vmatprep.subr.mxu0 0.0
    %957 = vmatpush1.msra.mxu0 0.0
    %958 = vmatprep.subr.mxu0 0.0
    %959 = vmatpush1.msra.mxu0 0.0
    %960 = vmatprep.subr.mxu0 0.0
    %961 = vmatpush1.msra.mxu0 0.0
    %962 = vmatprep.subr.mxu0 0.0
    %963 = vmatpush1.msra.mxu0 0.0
    %964 = vmatprep.subr.mxu0 0.0
    %965 = vmatpush1.msra.mxu0 0.0
    %966 = vmatprep.subr.mxu0 0.0
    %967 = vmatpush1.msra.mxu0 0.0
    %968 = vmatprep.subr.mxu0 0.0
    %969 = vmatpush1.msra.mxu0 0.0
    %970 = vmatprep.subr.mxu0 0.0
    %971 = vmatpush1.msra.mxu0 0.0
    %972 = vmatprep.subr.mxu0 0.0
    %973 = vmatpush1.msra.mxu0 0.0
    %974 = vmatprep.subr.mxu0 0.0
    %975 = vmatpush1.msra.mxu0 0.0
    %976 = vmatprep.subr.mxu0 0.0
    %977 = vmatpush1.msra.mxu0 0.0
    %978 = vmatprep.subr.mxu0 0.0
    %979 = vmatpush1.msra.mxu0 0.0
    %980 = vmatprep.subr.mxu0 0.0
    %981 = vmatpush1.msra.mxu0 0.0
    %982 = vmatprep.subr.mxu0 0.0
    %983 = vmatpush1.msra.mxu0 0.0
    %984 = vmatprep.subr.mxu0 0.0
    %985 = vmatpush1.msra.mxu0 0.0
    %986 = vmatprep.subr.mxu0 0.0
    %987 = vmatpush1.msra.mxu0 0.0
    %988 = vmatprep.subr.mxu0 0.0
    %989 = vmatpush1.msra.mxu0 0.0
    %990 = vmatprep.subr.mxu0 0.0
    %991 = vmatpush1.msra.mxu0 0.0
    %992 = vmatprep.subr.mxu0 0.0
    %993 = vmatpush1.msra.mxu0 0.0
    %994 = vmatprep.subr.mxu0 0.0
    %995 = vmatpush1.msra.mxu0 0.0
    %996 = vmatprep.subr.mxu0 0.0
    %997 = vmatpush1.msra.mxu0 0.0
    %998 = vmatprep.subr.mxu0 0.0
    %999 = vmatpush1.msra.mxu0 0.0
    %1000 = vmatprep.subr.mxu0 0.0
    %1001 = vmatpush1.msra.mxu0 0.0
    %1002 = vmatprep.subr.mxu0 0.0
    %1003 = vmatpush1.msra.mxu0 0.0
    %1004 = vmatprep.subr.mxu0 0.0
    %1005 = vmatpush1.msra.mxu0 0.0
    %1006 = vmatprep.subr.mxu0 0.0
    %1007 = vmatpush1.msra.mxu0 0.0
    %1008 = vmatprep.subr.mxu0 0.0
    %1009 = vmatpush1.msra.mxu0 0.0
    %1010 = vmatprep.subr.mxu0 0.0
    %1011 = vmatpush1.msra.mxu0 0.0
    %1012 = vmatprep.mubr.f32.mxu0 0.0
    %1013 = vmatmul.mubr.f32.gmra.mrb[0].mxu0 %v946
    %v1014 = vpop.f32.mrb[0].mxu0
    %v1015 = vadd.f32 0.0, %v1014
    %v1016 = vpop.f32.mrb[0].mxu0
    %v1017 = vadd.f32 0.0, %v1016
    %1018 = vdwg.mxu0
    %v1019 = vsel %vm301, %v1015, %v1017
    %v1020 = vsel %vm379, %v287, %v271
    %v1021 = vadd.f32 %v1019, %v1020
    %v1022 = vxor.u32 %v1021, 2147483648
    %v1023 = vmul.f32 %v1022, 1.442695
    %v1024 = vpow.pop %v1023
    %v1025 = vadd.f32 %v1024, 1.0
    %v1026 = vrcp.pop %v1025
    %v1027 = vmul.f32 1.0, %v1026
    %v1028 = vtanh.pop %v1021
    %v1029 = vmul.f32 %v1027, %v936
    %1031 = vrot.lane.b32.xlu0 %v1028, 64
    %v1032 = vpop.permute.xlu0 %1031
    %v1034 = vmul.f32 %v1027, %v1032
    %1036 = vrot.lane.b32.xlu0 %v1034, 32
    %v1037 = vpop.permute.xlu0 %1036
    %v1039 = vadd.f32 %v1029, %v1037
    %v1040 = vtanh.pop %v1039
    %1042 = vrot.lane.b32.xlu0 %v1040, 64
    %v1043 = vpop.permute.xlu0 %1042
    %v1045 = vmul.f32 %v1027, %v1043
    %1047 = vrot.lane.b32.xlu0 %v1045, 32
    %v1048 = vpop.permute.xlu0 %1047
    %v1049 = vsel %vm189, %v1048, 0
    %1051 = vmatprep.subr.mxu0 %v292
    %1052 = vmatpush1.msra.mxu0 %v291
    %1053 = vmatprep.subr.mxu0 %v294
    %1054 = vmatpush1.msra.mxu0 %v293
    %1055 = vmatprep.subr.mxu0 %v296
    %1056 = vmatpush1.msra.mxu0 %v295
    %1057 = vmatprep.subr.mxu0 %v298
    %1058 = vmatpush1.msra.mxu0 %v297
    %1059 = vmatprep.subr.mxu0 0.0
    %1060 = vmatpush1.msra.mxu0 0.0
    %1061 = vmatprep.subr.mxu0 0.0
    %1062 = vmatpush1.msra.mxu0 0.0
    %1063 = vmatprep.subr.mxu0 0.0
    %1064 = vmatpush1.msra.mxu0 0.0
    %1065 = vmatprep.subr.mxu0 0.0
    %1066 = vmatpush1.msra.mxu0 0.0
    %1067 = vmatprep.subr.mxu0 0.0
    %1068 = vmatpush1.msra.mxu0 0.0
    %1069 = vmatprep.subr.mxu0 0.0
    %1070 = vmatpush1.msra.mxu0 0.0
    %1071 = vmatprep.subr.mxu0 0.0
    %1072 = vmatpush1.msra.mxu0 0.0
    %1073 = vmatprep.subr.mxu0 0.0
    %1074 = vmatpush1.msra.mxu0 0.0
    %1075 = vmatprep.subr.mxu0 0.0
    %1076 = vmatpush1.msra.mxu0 0.0
    %1077 = vmatprep.subr.mxu0 0.0
    %1078 = vmatpush1.msra.mxu0 0.0
    %1079 = vmatprep.subr.mxu0 0.0
    %1080 = vmatpush1.msra.mxu0 0.0
    %1081 = vmatprep.subr.mxu0 0.0
    %1082 = vmatpush1.msra.mxu0 0.0
    %1083 = vmatprep.subr.mxu0 0.0
    %1084 = vmatpush1.msra.mxu0 0.0
    %1085 = vmatprep.subr.mxu0 0.0
    %1086 = vmatpush1.msra.mxu0 0.0
    %1087 = vmatprep.subr.mxu0 0.0
    %1088 = vmatpush1.msra.mxu0 0.0
    %1089 = vmatprep.subr.mxu0 0.0
    %1090 = vmatpush1.msra.mxu0 0.0
    %1091 = vmatprep.subr.mxu0 0.0
    %1092 = vmatpush1.msra.mxu0 0.0
    %1093 = vmatprep.subr.mxu0 0.0
    %1094 = vmatpush1.msra.mxu0 0.0
    %1095 = vmatprep.subr.mxu0 0.0
    %1096 = vmatpush1.msra.mxu0 0.0
    %1097 = vmatprep.subr.mxu0 0.0
    %1098 = vmatpush1.msra.mxu0 0.0
    %1099 = vmatprep.subr.mxu0 0.0
    %1100 = vmatpush1.msra.mxu0 0.0
    %1101 = vmatprep.subr.mxu0 0.0
    %1102 = vmatpush1.msra.mxu0 0.0
    %1103 = vmatprep.subr.mxu0 0.0
    %1104 = vmatpush1.msra.mxu0 0.0
    %1105 = vmatprep.subr.mxu0 0.0
    %1106 = vmatpush1.msra.mxu0 0.0
    %1107 = vmatprep.subr.mxu0 0.0
    %1108 = vmatpush1.msra.mxu0 0.0
    %1109 = vmatprep.subr.mxu0 0.0
    %1110 = vmatpush1.msra.mxu0 0.0
    %1111 = vmatprep.subr.mxu0 0.0
    %1112 = vmatpush1.msra.mxu0 0.0
    %1113 = vmatprep.subr.mxu0 0.0
    %1114 = vmatpush1.msra.mxu0 0.0
    %1115 = vmatprep.mubr.f32.mxu0 0.0
    %1116 = vmatmul.mubr.f32.gmra.mrb[0].mxu0 %v1049
    %v1117 = vpop.f32.mrb[0].mxu0
    %v1118 = vadd.f32 0.0, %v1117
    %v1119 = vpop.f32.mrb[0].mxu0
    %v1120 = vadd.f32 0.0, %v1119
    %1121 = vdwg.mxu0
    %v1122 = vsel %vm301, %v1118, %v1120
    %v1124 = vrot.slane %v287, 4
    %v1127 = vrot.slane %v271, 4
    %v1129 = vsel %vm379, %v1124, %v1127
    %v1130 = vadd.f32 %v1122, %v1129
    %v1131 = vxor.u32 %v1130, 2147483648
    %v1132 = vmul.f32 %v1131, 1.442695
    %v1133 = vpow.pop %v1132
    %v1134 = vadd.f32 %v1133, 1.0
    %v1135 = vrcp.pop %v1134
    %v1136 = vmul.f32 1.0, %v1135
    %v1137 = vtanh.pop %v1130
    %v1138 = vmul.f32 %v1136, %v1039
    %1140 = vrot.lane.b32.xlu0 %v1137, 64
    %v1141 = vpop.permute.xlu0 %1140
    %v1143 = vmul.f32 %v1136, %v1141
    %1145 = vrot.lane.b32.xlu0 %v1143, 32
    %v1146 = vpop.permute.xlu0 %1145
    %v1148 = vadd.f32 %v1138, %v1146
    %v1149 = vtanh.pop %v1148
    %1151 = vrot.lane.b32.xlu0 %v1149, 64
    %v1152 = vpop.permute.xlu0 %1151
    %v1154 = vmul.f32 %v1136, %v1152
    %1156 = vrot.lane.b32.xlu0 %v1148, 64
    %v1157 = vpop.permute.xlu0 %1156
    %v1159 = vadd.f32 %v1154, %v1157
    %v1160 = vmul.f32 %v1159, %v1159
    %1162 = vrot.lane.b32.xlu0 %v1160, 32
    %v1163 = vpop.permute.xlu0 %1162
    %v1165 = vsel %vm189, %v1163, 0.0
    %1166 = vadd.xlane.f32.xlu0 %v1165
    %v1167 = vpop.xlane.xlu0 %1166
    %v1168 = vrot.slane %v1167, 4
    %v1169 = vadd.f32 %v1167, %v1168
    %v1170 = vrot.slane %v1169, 2
    %v1171 = vadd.f32 %v1169, %v1170
    %v1172 = vrot.slane %v1171, 1
    %v1173 = vadd.f32 %v1171, %v1172
    %s1174 = vtos %v1173
    %v1175 = vstv %s1174
    %v1176 = vrsqrt.pop %v1175
    %v1177 = vmul.f32 %v1159, %v1176
    %1179 = vrot.lane.b32.xlu0 %v1177, 32
    %v1180 = vpop.permute.xlu0 %1179
    %vm1182 = vcmask 253952
    %1183 = vst.msk [vmem:[#allocation2] sm:$0x1] %vm1182, %v1180
    %1184 = vrot.lane.b32.xlu0 %v1177, 64
    %v1185 = vpop.permute.xlu0 %1184
    %vm1187 = vcmask 517377
    %1188 = vst.msk [vmem:[#allocation2 - $0x1] sm:$0x2] %vm1187, %v1185
    %vm1189 = vcmask 256002
    %1190 = vst.msk [vmem:[#allocation2 - $0x1] sm:$0x4] %vm1189, %v1180
    %vm1191 = vcmask 519427
    %1192 = vst.msk [vmem:[#allocation2 - $0x2] sm:$0x8] %vm1191, %v1185
    %vm1193 = vcmask 258052
    %1194 = vst.msk [vmem:[#allocation2 - $0x2] sm:$0x10] %vm1193, %v1180
    %vm1195 = vcmask 521477
    %1196 = vst.msk [vmem:[#allocation2 - $0x3] sm:$0x20] %vm1195, %v1185
    %vm1197 = vcmask 260102
    %1198 = vst.msk [vmem:[#allocation2 - $0x3] sm:$0x40] %vm1197, %v1180
    %vm1199 = vcmask 523527
    %1200 = vst.msk [vmem:[#allocation2 - $0x4] sm:$0x80] %vm1199, %v1185
    %v1201 = vld [vmem:[#allocation2] sm:$0xf]
    %v1202 = vld [vmem:[%s7] sm:$0xff]
    %v1203 = vld [vmem:[%s7 + $0x8] sm:$0xff]
    %v1204 = vld [vmem:[%s7 + $0x10] sm:$0xff]
    %v1205 = vld [vmem:[%s7 + $0x18] sm:$0xff]
    %v1206 = vld [vmem:[%s7 + $0x20] sm:$0xff]
    %v1207 = vld [vmem:[%s7 + $0x28] sm:$0xff]
    %v1208 = vld [vmem:[%s7 + $0x30] sm:$0xff]
    %v1209 = vld [vmem:[%s7 + $0x38] sm:$0xff]
    %v1210 = vld [vmem:[%s8] sm:$0x1]
    %v1212 = vlaneseq
    %v1213 = vshrl.u32 %v1212, 7
    %v1214 = vsub.s32 0, %v1213
    %v1215 = vrot.slane %v1210, %v1214
    %v1218 = vsel %vm71, %v1201, 0
    %1220 = vmatprep.subr.mxu0 0.0
    %1221 = vmatpush1.msra.mxu0 %v1202
    %1222 = vmatprep.subr.mxu0 0.0
    %1223 = vmatpush1.msra.mxu0 %v1203
    %1224 = vmatprep.subr.mxu0 0.0
    %1225 = vmatpush1.msra.mxu0 %v1204
    %1226 = vmatprep.subr.mxu0 0.0
    %1227 = vmatpush1.msra.mxu0 %v1205
    %1228 = vmatprep.subr.mxu0 0.0
    %1229 = vmatpush1.msra.mxu0 %v1206
    %1230 = vmatprep.subr.mxu0 0.0
    %1231 = vmatpush1.msra.mxu0 %v1207
    %1232 = vmatprep.subr.mxu0 0.0
    %1233 = vmatpush1.msra.mxu0 %v1208
    %1234 = vmatprep.subr.mxu0 0.0
    %1235 = vmatpush1.msra.mxu0 %v1209
    %1236 = vmatprep.subr.mxu0 0.0
    %1237 = vmatpush1.msra.mxu0 0.0
    %1238 = vmatprep.subr.mxu0 0.0
    %1239 = vmatpush1.msra.mxu0 0.0
    %1240 = vmatprep.subr.mxu0 0.0
    %1241 = vmatpush1.msra.mxu0 0.0
    %1242 = vmatprep.subr.mxu0 0.0
    %1243 = vmatpush1.msra.mxu0 0.0
    %1244 = vmatprep.subr.mxu0 0.0
    %1245 = vmatpush1.msra.mxu0 0.0
    %1246 = vmatprep.subr.mxu0 0.0
    %1247 = vmatpush1.msra.mxu0 0.0
    %1248 = vmatprep.subr.mxu0 0.0
    %1249 = vmatpush1.msra.mxu0 0.0
    %1250 = vmatprep.subr.mxu0 0.0
    %1251 = vmatpush1.msra.mxu0 0.0
    %1252 = vmatprep.subr.mxu0 0.0
    %1253 = vmatpush1.msra.mxu0 0.0
    %1254 = vmatprep.subr.mxu0 0.0
    %1255 = vmatpush1.msra.mxu0 0.0
    %1256 = vmatprep.subr.mxu0 0.0
    %1257 = vmatpush1.msra.mxu0 0.0
    %1258 = vmatprep.subr.mxu0 0.0
    %1259 = vmatpush1.msra.mxu0 0.0
    %1260 = vmatprep.subr.mxu0 0.0
    %1261 = vmatpush1.msra.mxu0 0.0
    %1262 = vmatprep.subr.mxu0 0.0
    %1263 = vmatpush1.msra.mxu0 0.0
    %1264 = vmatprep.subr.mxu0 0.0
    %1265 = vmatpush1.msra.mxu0 0.0
    %1266 = vmatprep.subr.mxu0 0.0
    %1267 = vmatpush1.msra.mxu0 0.0
    %1268 = vmatprep.subr.mxu0 0.0
    %1269 = vmatpush1.msra.mxu0 0.0
    %1270 = vmatprep.subr.mxu0 0.0
    %1271 = vmatpush1.msra.mxu0 0.0
    %1272 = vmatprep.subr.mxu0 0.0
    %1273 = vmatpush1.msra.mxu0 0.0
    %1274 = vmatprep.subr.mxu0 0.0
    %1275 = vmatpush1.msra.mxu0 0.0
    %1276 = vmatprep.subr.mxu0 0.0
    %1277 = vmatpush1.msra.mxu0 0.0
    %1278 = vmatprep.subr.mxu0 0.0
    %1279 = vmatpush1.msra.mxu0 0.0
    %1280 = vmatprep.subr.mxu0 0.0
    %1281 = vmatpush1.msra.mxu0 0.0
    %1282 = vmatprep.subr.mxu0 0.0
    %1283 = vmatpush1.msra.mxu0 0.0
    %1284 = vmatprep.mubr.f32.mxu0 0.0
    %1285 = vmatmul.mubr.f32.gmra.mrb[0].mxu0 %v1218
    %v1286 = vpop.f32.mrb[0].mxu0
    %v1287 = vadd.f32 %v1215, %v1286
    %v1288 = vpop.f32.mrb[0].mxu0
    %1289 = vdwg.mxu0
    %vm1290 = vcmask 125952
    %v1291 = vsel %vm1290, %v1287, -inf
    %1292 = vmax.xlane.f32.xlu0 %v1291
    %v1293 = vpop.xlane.xlu0 %1292
    %v1294 = vsub.f32 %v1287, %v1293
    %v1295 = vmul.f32 %v1294, 1.442695
    %v1296 = vpow.pop %v1295
    %v1297 = vsel %vm1290, %v1296, 0.0
    %1298 = vadd.xlane.f32.xlu0 %v1297
    %v1299 = vpop.xlane.xlu0 %1298
    %v1300 = vrcp.pop %v1299
    %v1301 = vmul.f32 %v1296, %v1300
    %1302 = vst.msk [vmem:[#allocation3] sm:$0xf] %vm1290, %v1301
    // Predicated region
    $region38: #{doc2vec_forward.1} parent=1 // pred_check
      _
    $region39: #{doc2vec_forward.1} parent=1 // pred_check_branch
      %1304 = sbr.rel (0) target = $region41
    $region40: #{doc2vec_forward.1} parent=1 // pred_region
      %s1306 = ssub.s32 64, 64
      %1307 = vsyncadd [#allocation4], %s1306
      %s1309 = sshll.u32 [#allocation3], 4
      %s1310 = int_to_ptr.vmem [resolvable:$true] %s1309
      %1312 = dma.vmem_to_hbm [thread:$0]  %s1310, 64, %s9, [#allocation4]
    $region41: #{doc2vec_forward.1} parent=1 // pred_fallthru
      _
    // Predicated region
    $region42: #{doc2vec_forward.1} parent=1 // pred_check
      _
    $region43: #{doc2vec_forward.1} parent=1 // pred_check_branch
      %1314 = sbr.rel (0) target = $region45
    $region44: #{doc2vec_forward.1} parent=1 // pred_region
      %1315 = dma.done [#allocation4], 64
    $region45: #{doc2vec_forward.1} parent=1 // pred_fallthru
      _
    %1316 = vsyncpa [#allocation4], 1

</llo_original>
